<compile_context>
chip_gen: v7x
topology: tpu7x:2x2x1
jax: 0.10.0
libtpu: 0.0.40
codegen_flags: <defaults>
</compile_context>

<pallas_src>
import functools

import numpy as np
import jax
import jax.numpy as jnp
from jax.experimental import pallas as pl
from jax.experimental.pallas import tpu as pltpu

VMEM = pl.BlockSpec(memory_space=pltpu.MemorySpace.VMEM)
SMEM = pl.BlockSpec(memory_space=pltpu.MemorySpace.SMEM)


def _round_up(x, m):
    return ((x + m - 1) // m) * m


def _pick_row_tile(n):
    # Prefer big tiles (amortize ~0.35us/step pipeline overhead; >=512-row tiles
    # reach ~85% of HBM roofline).  Tiles are multiples of 1024 so the
    # lane-dense seg block (row_tile//128, 128) keeps a sublane-dim multiple of
    # 8; otherwise fall back to a single full-array tile (fine for small N).
    for t in (2048, 1024):
        if n % t == 0:
            return t
    return n


# --------------------------------------------------------------------------- #
# Kernel A: fused per-pixel seg logit + superpixel scatter-SUM
#   seg out   : lane-dense (N//128, 128) f32
#   acc out   : (nsp_pad, c_img+2) f32 per-segment sums of [img | mask | ones]
# --------------------------------------------------------------------------- #
def pallas_backbone_segment_sum(wseg, x_s, x_in, sp_ids, *, num_segments,
                                row_tile):
    c_img = x_s.shape[0]
    n, c_aug = x_in.shape
    nsp = _round_up(max(num_segments, 8), 8)   # pad to a mult. of 128 at prod. nsp
    assert n % row_tile == 0 and row_tile % 128 == 0
    grid = (n // row_tile,)
    rb = row_tile // 128

    def kernel(wseg_ref, xs_ref, x_ref, sp_ref, seg_ref, acc_ref):
        i = pl.program_id(0)

        # --- per-pixel seg logit, directly in lane-dense (rb, 128) layout ----
        # c_img VPU FMAs with SMEM scalar weights; bias folded as wseg[c_img].
        seg = jnp.zeros((rb, 128), jnp.float32) + wseg_ref[c_img]
        for c in range(c_img):
            seg = seg + wseg_ref[c] * xs_ref[c]
        seg_ref[...] = seg

        # --- superpixel scatter-sum: in-kernel one-hot, one f32 MXU matmul ---
        ids = sp_ref[...]                                   # (1, row_tile) int32
        seg_iota = jax.lax.broadcasted_iota(jnp.int32, (nsp, row_tile), 0)
        onehot = jnp.where(seg_iota == ids, 1.0, 0.0)
        part = jnp.dot(onehot, x_ref[...],
                       preferred_element_type=jnp.float32)  # (nsp, c_aug)

        @pl.when(i == 0)
        def _():
            acc_ref[...] = jnp.zeros_like(acc_ref)

        acc_ref[...] += part
        # TODO(synk): at production nsp, tile the segment axis (scalar-prefetch
        # a per-row-tile min/max sp id) instead of a dense (nsp, row_tile)
        # one-hot; on v7x add a leading size-2 "parallel" axis over pixel
        # halves and combine the two partial sums in a cheap epilogue.

    return pl.pallas_call(
        kernel,
        out_shape=(jax.ShapeDtypeStruct((n // 128, 128), jnp.float32),
                   jax.ShapeDtypeStruct((nsp, c_aug), jnp.float32)),
        grid=grid,
        in_specs=[SMEM,                                            # seg weights
                  pl.BlockSpec((c_img, rb, 128), lambda i: (0, i, 0)),
                  pl.BlockSpec((row_tile, c_aug), lambda i: (i, 0)),
                  pl.BlockSpec((1, row_tile), lambda i: (0, i))],
        out_specs=(pl.BlockSpec((rb, 128), lambda i: (i, 0)),
                   pl.BlockSpec((nsp, c_aug), lambda i: (0, 0))),
        # row axis carries the segment-sum accumulator -> must be "arbitrary"
        compiler_params=pltpu.CompilerParams(
            dimension_semantics=("arbitrary",)),
    )(wseg, x_s, x_in, sp_ids)


# --------------------------------------------------------------------------- #
# Kernel B+C fused: embedding projection -> GCN -> normalize (original path)
#                   and GCN -> per-image avg_pool -> normalize (aug path)
# --------------------------------------------------------------------------- #
def pallas_graph_fused(a_norm, x_mean, a_aug, x_mean_aug, group_ids,
                       w_emb, b_emb, w_g, b_g, *, num_groups):
    ns = a_norm.shape[0]
    nk = a_aug.shape[0]
    d = w_g.shape[1]
    gp = _round_up(max(num_groups, 8), 8)

    def kernel(a_ref, xm_ref, aa_ref, xma_ref, g_ref, we_ref, be_ref,
               wg_ref, bg_ref, ori_ref, proto_ref):
        def l2norm(v):                                       # F.normalize(dim=1)
            ss = jnp.sum(v * v, axis=1, keepdims=True)
            return v * jax.lax.rsqrt(jnp.maximum(ss, 1e-24))

        # backbone embedding projection applied AFTER the superpixel mean
        # (linear, so identical to scatter_mean of per-pixel embeddings).
        x = jnp.dot(xm_ref[...], we_ref[...],
                    preferred_element_type=jnp.float32) + be_ref[...]
        xa = jnp.dot(xma_ref[...], we_ref[...],
                     preferred_element_type=jnp.float32) + be_ref[...]

        # original graph: (A @ x) @ W + b  ->  L2 normalize (rsqrt on the EUP)
        h = jnp.dot(jnp.dot(a_ref[...], x, preferred_element_type=jnp.float32),
                    wg_ref[...], preferred_element_type=jnp.float32) + bg_ref[...]
        ori_ref[...] = l2norm(h)

        # augmented graph -> per-image avg_pool (in-kernel one-hot) -> normalize
        ha = jnp.dot(jnp.dot(aa_ref[...], xa, preferred_element_type=jnp.float32),
                     wg_ref[...], preferred_element_type=jnp.float32) + bg_ref[...]
        giota = jax.lax.broadcasted_iota(jnp.int32, (gp, nk), 0)
        oneh = jnp.where(giota == g_ref[...], 1.0, 0.0)
        counts = jnp.maximum(jnp.sum(oneh, axis=1, keepdims=True), 1.0)
        means = jnp.dot(oneh, ha, preferred_element_type=jnp.float32) / counts
        proto_ref[...] = l2norm(means)

    # TODO(synk): at production node counts a_norm (ns^2) as a whole-array VMEM
    # block needs a row grid or vmem_limit_bytes headroom on v7x (64 MiB).
    return pl.pallas_call(
        kernel,
        out_shape=(jax.ShapeDtypeStruct((ns, d), jnp.float32),
                   jax.ShapeDtypeStruct((gp, d), jnp.float32)),
        in_specs=[VMEM] * 9,
        out_specs=(VMEM, VMEM),
    )(a_norm, x_mean, a_aug, x_mean_aug, group_ids, w_emb, b_emb, w_g, b_g)


# --------------------------------------------------------------------------- #
# Kernel D: contrastive logits  [q @ feat_aug.T | q @ queue] / T
#   feat_aug.T and queue stay separate (no per-step HBM concat of the queue);
#   output lane-padded to a 128 multiple, rows padded to a static bucket.
# --------------------------------------------------------------------------- #
def pallas_contrastive_logits(q, feat_aug_t, queue, T):
    npad, _ = q.shape
    bs = feat_aug_t.shape[1]
    k = queue.shape[1]
    width = bs + k
    wpad = _round_up(width, 128)
    inv_t = 1.0 / float(T)

    def kernel(q_ref, fa_ref, qu_ref, o_ref):
        qv = q_ref[...]
        l_batch = jnp.dot(qv, fa_ref[...], preferred_element_type=jnp.float32)
        l_mem = jnp.dot(qv, qu_ref[...], preferred_element_type=jnp.float32)
        parts = [l_batch, l_mem]
        if wpad > width:
            parts.append(jnp.zeros((npad, wpad - width), jnp.float32))
        o_ref[...] = jnp.concatenate(parts, axis=1) * inv_t   # single full store

    # TODO(synk): at MoCo-scale K tile the queue columns with a grid axis.
    return pl.pallas_call(
        kernel,
        out_shape=jax.ShapeDtypeStruct((npad, wpad), jnp.float32),
        in_specs=[VMEM, VMEM, VMEM],
        out_specs=VMEM,
    )(q, feat_aug_t, queue)


# --------------------------------------------------------------------------- #
# Stand-in loss (external module) -- plain JAX
# --------------------------------------------------------------------------- #
def balanced_bce(output, label):
    # TODO(synk): BalancedCrossEntropyLoss is external; this is the standard
    # balanced sigmoid-CE (size_average=True) used in that codebase, plain JAX.
    labels = (label >= 0.5).astype(jnp.float32)
    num_pos = jnp.sum(labels)
    num_neg = jnp.sum(1.0 - labels)
    w = num_neg / (num_pos + num_neg)
    out_gt_zero = (output >= 0).astype(jnp.float32)
    loss_val = output * (labels - out_gt_zero) - jnp.log1p(
        jnp.exp(output - 2.0 * output * out_gt_zero))
    loss_pos = -jnp.sum(labels * loss_val)
    loss_neg = -jnp.sum((1.0 - labels) * loss_val)
    final = w * loss_pos + (1.0 - w) * loss_neg
    return final / output.shape[0]


def grid_adjacency(rows, cols):
    n = rows * cols
    A = np.zeros((n, n), np.float32)
    for r in range(rows):
        for c in range(cols):
            i = r * cols + c
            A[i, i] = 1.0
            for dr, dc in ((1, 0), (-1, 0), (0, 1), (0, -1)):
                rr, cc = r + dr, c + dc
                if 0 <= rr < rows and 0 <= cc < cols:
                    A[i, rr * cols + cc] = 1.0
    return A


# --------------------------------------------------------------------------- #
# Stage 1 (jitted): backbone seg + scatter_mean + both graph paths
# --------------------------------------------------------------------------- #
@functools.partial(jax.jit, static_argnames=("num_segments", "num_keep"))
def seggcn_stage1(img, mask, sp_seg, batch_info, keep_nodes, a_norm,
                  w_bb, b_bb, w_g, b_g, *, num_segments, num_keep):
    bs, _, h, w = mask.shape
    c_img = img.shape[1]
    D = w_g.shape[0]
    N = bs * h * w
    assert N % 128 == 0

    # 'b d h w -> (b h w) d'
    x_flat = jnp.transpose(img, (0, 2, 3, 1)).reshape(N, c_img)
    mask_flat = jnp.transpose(mask, (0, 2, 3, 1)).reshape(N, 1)

    # superpixel offset bookkeeping (as in forward_train)
    sp_max = sp_seg.reshape(bs, -1).max(axis=1)
    sp_rolled = jnp.roll(sp_max, 1).at[0].set(0)
    offset_mask = jnp.cumsum(sp_rolled) + jnp.arange(bs)
    sp_flat = (sp_seg + offset_mask[:, None, None]).reshape(-1).astype(jnp.int32)

    # TODO(synk): the real backbone is external; stand-in is a 1x1 conv whose
    # column 0 is the seg head and columns 1..D the embedding head.
    # Kernel A consumes the RAW pixel features [img | mask | ones]; the
    # embedding projection happens after the segment mean (linear => same).
    x_in = jnp.concatenate(
        [x_flat, mask_flat, jnp.ones((N, 1), jnp.float32)], axis=1)  # (N, c+2)
    x_s = jnp.transpose(x_flat, (1, 0)).reshape(c_img, N // 128, 128)
    sp_ids = sp_flat.reshape(1, N)
    wseg = jnp.concatenate([w_bb[:, 0], b_bb[0, 0:1]], axis=0)       # (c+1,) SMEM

    row_tile = _pick_row_tile(N)
    seg_ld, seg_sums = pallas_backbone_segment_sum(
        wseg, x_s, x_in, sp_ids, num_segments=num_segments, row_tile=row_tile)

    seg = jnp.transpose(seg_ld.reshape(bs, h, w, 1), (0, 3, 1, 2))   # NCHW
    cam_loss = balanced_bce(seg, mask)

    # segment sums -> means (tiny epilogue; counts kept raw, no reinterpretation)
    counts = jnp.maximum(seg_sums[:num_segments, c_img + 1:c_img + 2], 1.0)
    x_mean = seg_sums[:num_segments, :c_img] / counts        # mean raw features
    mask_sp_mean = seg_sums[:num_segments, c_img] / counts[:, 0]

    # superpixel CAM labels
    mask_sp = (mask_sp_mean > 0.5).astype(jnp.int32)
    mask_sp_offset = (mask_sp + batch_info) * mask_sp

    # augmented-graph node selection (static count -> jit-friendly gather)
    keep_idx = jnp.nonzero(keep_nodes, size=num_keep)[0]
    x_mean_aug = jnp.take(x_mean, keep_idx, axis=0)
    a_aug = jnp.take(jnp.take(a_norm, keep_idx, axis=0), keep_idx, axis=1)
    cam_sp_offset_aug = jnp.take(mask_sp_offset, keep_idx)

    # TODO(synk): real graph_network is external; stand-in is one GCN layer.
    w_emb = w_bb[:, 1:1 + D]
    b_emb = b_bb[:, 1:1 + D]
    feat_ori, proto = pallas_graph_fused(
        a_norm, x_mean, a_aug, x_mean_aug,
        cam_sp_offset_aug.reshape(1, num_keep).astype(jnp.int32),
        w_emb, b_emb, w_g, b_g, num_groups=bs + 1)
    feat_aug = proto[1:1 + bs]                                # avg_pool[1:], L2-normed

    return cam_loss, feat_ori, feat_aug, mask_sp_offset, cam_sp_offset_aug


# --------------------------------------------------------------------------- #
# Stage 2 (jitted, shape-static): logits + queue update + debug stats
# --------------------------------------------------------------------------- #
@functools.partial(jax.jit, static_argnames=("K", "T"))
def seggcn_stage2(feat_ori, feat_aug, mask_idx_pad, n_valid, queue, queue_ptr,
                  *, K, T):
    bs = feat_aug.shape[0]
    q = jnp.take(feat_ori, mask_idx_pad, axis=0)              # (npad, D), padded rows junk
    logits_pad = pallas_contrastive_logits(q, feat_aug.T, queue, T)

    # MoCo queue update (assumes K % bs == 0, like the reference)
    new_queue = jax.lax.dynamic_update_slice_in_dim(
        queue, feat_aug.T, queue_ptr, axis=1)
    new_ptr = (queue_ptr + bs) % K

    # debug stats; q variance masked to the valid (un-padded) rows, unbiased
    nvf = n_valid.astype(jnp.float32)
    valid = (jnp.arange(q.shape[0]) < n_valid).astype(jnp.float32)[:, None]
    q_mean = jnp.sum(q * valid, axis=0, keepdims=True) / jnp.maximum(nvf, 1.0)
    q_varc = jnp.sum(((q - q_mean) ** 2) * valid, axis=0) / jnp.maximum(nvf - 1.0, 1.0)
    q_var = jnp.mean(q_varc)
    aug_var = jnp.mean(jnp.var(feat_aug, axis=1, ddof=1))
    return logits_pad, new_queue, new_ptr, q_var, aug_var


# --------------------------------------------------------------------------- #
# SegGCN.forward_train
# --------------------------------------------------------------------------- #
def seggcn_forward_train(img, mask, sp_seg, batch_info, keep_nodes, a_norm,
                         w_bb, b_bb, w_g, b_g, queue, queue_ptr, K, T,
                         num_segments, num_keep):
    dict_return = {}
    bs = mask.shape[0]

    cam_loss, feat_ori, feat_aug, mask_sp_offset, cam_sp_offset_aug = \
        seggcn_stage1(img, mask, sp_seg, batch_info, keep_nodes, a_norm,
                      w_bb, b_bb, w_g, b_g,
                      num_segments=num_segments, num_keep=num_keep)

    # TODO(synk): single host sync -- the number of foreground superpixels is
    # data-dependent exactly as in the PyTorch module (torch.nonzero).  Stage 2
    # itself stays shape-static (padded rows + traced valid count), so no
    # recompilation per distinct count.
    msp_np = np.asarray(jax.device_get(mask_sp_offset))
    assert len(np.unique(np.asarray(jax.device_get(cam_sp_offset_aug)))) == bs + 1
    mask_indexes_np = np.nonzero(msp_np)[0].astype(np.int32)
    n_valid = int(mask_indexes_np.shape[0])
    cam_sp_reduced = jnp.asarray(msp_np[mask_indexes_np] - 1)

    npad = _round_up(max(num_segments, 8), 8)
    idx_pad = np.zeros((npad,), np.int32)
    idx_pad[:n_valid] = mask_indexes_np

    logits_pad, new_queue, new_ptr, q_var, aug_var = seggcn_stage2(
        feat_ori, feat_aug, jnp.asarray(idx_pad),
        jnp.asarray(n_valid, dtype=jnp.int32),
        queue, jnp.asarray(queue_ptr, dtype=jnp.int32), K=K, T=T)

    logits = logits_pad[:n_valid, :bs + K]

    dict_return['q_var'] = q_var
    dict_return['aug_var'] = aug_var
    return logits, cam_sp_reduced, cam_loss, dict_return, new_queue, new_ptr


# --------------------------------------------------------------------------- #
if __name__ == "__main__":
    B, C_IMG, H, W = 2, 4, 16, 16
    D = 32        # p['gcn_kwargs']['output_dim']
    K = 64        # p['seggcn_kwargs']['K']
    T = 0.07      # p['seggcn_kwargs']['T']

    key = jax.random.PRNGKey(0)
    k_img, k_q, k_bb, k_g = jax.random.split(key, 4)

    img = jax.random.normal(k_img, (B, C_IMG, H, W), jnp.float32)

    # mask: left half of each image is foreground, shape (B, 1, H, W)
    col = jnp.arange(W)
    mask = jnp.broadcast_to((col < W // 2).astype(jnp.float32), (B, 1, H, W))

    # superpixels: 4x4 grid of 4x4 blocks per image -> labels 0..15 per image
    r = jnp.arange(H) // 4
    c = jnp.arange(W) // 4
    sp_local = (r[:, None] * 4 + c[None, :]).astype(jnp.int32)
    sp_seg = jnp.broadcast_to(sp_local, (B, H, W))

    n_sp_per_img = 16
    num_segments = B * n_sp_per_img                       # static (no host sync)
    batch_info = (jnp.arange(num_segments) // n_sp_per_img).astype(jnp.int32)

    keep_np = np.ones(num_segments, dtype=bool)           # data_aug.keep_nodes
    keep_np[3] = False
    keep_np[19] = False
    num_keep = int(keep_np.sum())                         # static (no host sync)
    keep_nodes = jnp.asarray(keep_np)

    # dense sym-normalized adjacency stand-in (block-diagonal over the batch)
    a_img = grid_adjacency(4, 4)
    a_full = np.zeros((num_segments, num_segments), np.float32)
    a_full[:16, :16] = a_img
    a_full[16:, 16:] = a_img
    d_inv_sqrt = 1.0 / np.sqrt(a_full.sum(1))
    a_norm = jnp.asarray(a_full * d_inv_sqrt[:, None] * d_inv_sqrt[None, :])

    # deterministic parameters: column 0 = seg head, columns 1..D = embeddings
    w_bb = 0.1 * jax.random.normal(k_bb, (C_IMG, 1 + D), jnp.float32)
    b_bb = jnp.zeros((1, 1 + D), jnp.float32)
    w_g = 0.1 * jax.random.normal(k_g, (D, D), jnp.float32)
    b_g = jnp.zeros((1, D), jnp.float32)

    # queue buffer: randn(dim, K) normalized along dim=0
    queue = jax.random.normal(k_q, (D, K), jnp.float32)
    queue = queue / jnp.maximum(
        jnp.sqrt(jnp.sum(queue * queue, axis=0, keepdims=True)), 1e-12)
    queue_ptr = 0

    logits, cam_sp_reduced, cam_loss, dbg, new_queue, new_ptr = \
        seggcn_forward_train(img, mask, sp_seg, batch_info, keep_nodes, a_norm,
                             w_bb, b_bb, w_g, b_g, queue, queue_ptr, K, T,
                             num_segments=num_segments, num_keep=num_keep)

    jax.block_until_ready((logits, cam_sp_reduced, cam_loss,
                           dbg['q_var'], dbg['aug_var'], new_queue, new_ptr))

    assert logits.shape == (cam_sp_reduced.shape[0], B + K)
    assert new_queue.shape == (D, K)
    assert np.all(np.isfinite(np.asarray(logits)))
    print("KERNEL_OK")
</pallas_src>

<mosaic_0001>
module attributes {stable_mosaic.version = 11 : i64} {
  func.func private @main(%arg0: i32) attributes {dimension_semantics = [#tpu.dimension_semantics<core_parallel>], iteration_bounds = array<i64: 2>, tpu.core_type = #tpu.core_type<sc_scalar_subcore>, window_params = []} {
    return
  }
}

module attributes {stable_mosaic.version = 11 : i64} {
  func.func private @main(%arg0: i32) attributes {dimension_semantics = [#tpu.dimension_semantics<core_parallel>], iteration_bounds = array<i64: 2>, tpu.core_type = #tpu.core_type<sc_scalar_subcore>, window_params = []} {
    return
  }
}

module attributes {stable_mosaic.version = 11 : i64} {
  func.func @kernel(%arg0: i32, %arg1: memref<5xf32, #tpu.memory_space<smem>>, %arg2: memref<4x4x128xf32, #tpu.memory_space<vmem>>, %arg3: memref<512x6xf32, #tpu.memory_space<vmem>>, %arg4: memref<1x512xi32, #tpu.memory_space<vmem>>, %arg5: memref<4x128xf32, #tpu.memory_space<vmem>>, %arg6: memref<32x6xf32, #tpu.memory_space<vmem>>) attributes {dimension_semantics = [#tpu.dimension_semantics<arbitrary>], iteration_bounds = array<i64: 1>, scalar_prefetch = 0 : i64, scratch_operands = 0 : i64, tpu.core_type = #tpu.core_type<tc>, window_params = [{transform_indices = @transform_0, window_bounds = array<i64: 5>}, {transform_indices = @transform_1, window_bounds = array<i64: 4, 4, 128>}, {transform_indices = @transform_2, window_bounds = array<i64: 512, 6>}, {transform_indices = @transform_3, window_bounds = array<i64: 1, 512>}, {transform_indices = @transform_4, window_bounds = array<i64: 4, 128>}, {pipeline_mode = #tpu.pipeline_mode<synchronous>, transform_indices = @transform_5, window_bounds = array<i64: 32, 6>}]} {
    %cst = arith.constant 0.000000e+00 : f32
    %0 = vector.broadcast %cst : f32 to vector<4x128xf32>
    %c4 = arith.constant 4 : index
    %1 = memref.load %arg1[%c4] : memref<5xf32, #tpu.memory_space<smem>>
    %2 = vector.broadcast %1 : f32 to vector<4x128xf32>
    %3 = arith.addf %0, %2 : vector<4x128xf32>
    %c0 = arith.constant 0 : index
    %4 = memref.load %arg1[%c0] : memref<5xf32, #tpu.memory_space<smem>>
    %c0_0 = arith.constant 0 : index
    %c0_1 = arith.constant 0 : index
    %c0_2 = arith.constant 0 : index
    %5 = vector.load %arg2[%c0_0, %c0_1, %c0_2] : memref<4x4x128xf32, #tpu.memory_space<vmem>>, vector<1x4x128xf32>
    %6 = vector.shape_cast %5 : vector<1x4x128xf32> to vector<4x128xf32>
    %7 = vector.broadcast %4 : f32 to vector<4x128xf32>
    %8 = arith.mulf %7, %6 : vector<4x128xf32>
    %9 = arith.addf %3, %8 : vector<4x128xf32>
    %c1 = arith.constant 1 : index
    %10 = memref.load %arg1[%c1] : memref<5xf32, #tpu.memory_space<smem>>
    %c1_3 = arith.constant 1 : index
    %c0_4 = arith.constant 0 : index
    %c0_5 = arith.constant 0 : index
    %11 = vector.load %arg2[%c1_3, %c0_4, %c0_5] : memref<4x4x128xf32, #tpu.memory_space<vmem>>, vector<1x4x128xf32>
    %12 = vector.shape_cast %11 : vector<1x4x128xf32> to vector<4x128xf32>
    %13 = vector.broadcast %10 : f32 to vector<4x128xf32>
    %14 = arith.mulf %13, %12 : vector<4x128xf32>
    %15 = arith.addf %9, %14 : vector<4x128xf32>
    %c2 = arith.constant 2 : index
    %16 = memref.load %arg1[%c2] : memref<5xf32, #tpu.memory_space<smem>>
    %c2_6 = arith.constant 2 : index
    %c0_7 = arith.constant 0 : index
    %c0_8 = arith.constant 0 : index
    %17 = vector.load %arg2[%c2_6, %c0_7, %c0_8] : memref<4x4x128xf32, #tpu.memory_space<vmem>>, vector<1x4x128xf32>
    %18 = vector.shape_cast %17 : vector<1x4x128xf32> to vector<4x128xf32>
    %19 = vector.broadcast %16 : f32 to vector<4x128xf32>
    %20 = arith.mulf %19, %18 : vector<4x128xf32>
    %21 = arith.addf %15, %20 : vector<4x128xf32>
    %c3 = arith.constant 3 : index
    %22 = memref.load %arg1[%c3] : memref<5xf32, #tpu.memory_space<smem>>
    %c3_9 = arith.constant 3 : index
    %c0_10 = arith.constant 0 : index
    %c0_11 = arith.constant 0 : index
    %23 = vector.load %arg2[%c3_9, %c0_10, %c0_11] : memref<4x4x128xf32, #tpu.memory_space<vmem>>, vector<1x4x128xf32>
    %24 = vector.shape_cast %23 : vector<1x4x128xf32> to vector<4x128xf32>
    %25 = vector.broadcast %22 : f32 to vector<4x128xf32>
    %26 = arith.mulf %25, %24 : vector<4x128xf32>
    %27 = arith.addf %21, %26 : vector<4x128xf32>
    %c0_12 = arith.constant 0 : index
    %c0_13 = arith.constant 0 : index
    %28 = vector.load %arg5[%c0_12, %c0_13] : memref<4x128xf32, #tpu.memory_space<vmem>>, vector<4x128xf32>
    tpu.vector_store %arg5[%c0_12, %c0_13], %27 {strides = array<i32>} : memref<4x128xf32, #tpu.memory_space<vmem>>, vector<4x128xf32>,
    %c0_14 = arith.constant 0 : index
    %c0_15 = arith.constant 0 : index
    %29 = vector.load %arg4[%c0_14, %c0_15] : memref<1x512xi32, #tpu.memory_space<vmem>>, vector<1x512xi32>
    %30 = tpu.iota {dimensions = array<i32: 0>} : vector<32x512xi32>
    %31 = vector.broadcast %29 : vector<1x512xi32> to vector<32x512xi32>
    %32 = arith.cmpi eq, %30, %31 : vector<32x512xi32>
    %cst_16 = arith.constant 1.000000e+00 : f32
    %cst_17 = arith.constant 0.000000e+00 : f32
    %33 = vector.broadcast %cst_16 : f32 to vector<32x512xf32>
    %34 = vector.broadcast %cst_17 : f32 to vector<32x512xf32>
    %35 = arith.select %32, %33, %34 : vector<32x512xi1>, vector<32x512xf32>
    %c0_18 = arith.constant 0 : index
    %c0_19 = arith.constant 0 : index
    %36 = vector.load %arg3[%c0_18, %c0_19] : memref<512x6xf32, #tpu.memory_space<vmem>>, vector<512x6xf32>
    %cst_20 = arith.constant dense<0.000000e+00> : vector<32x6xf32>
    %37 = tpu.matmul %35, %36, %cst_20 {dimension_numbers = #tpu.dot_dimension_numbers<[1], [0], [0], [1], [0, 0, 1, 1], [], []>} : vector<32x512xf32>, vector<512x6xf32>, vector<32x6xf32> -> vector<32x6xf32>
    %c0_i32 = arith.constant 0 : i32
    %38 = arith.cmpi eq, %arg0, %c0_i32 : i32
    %39 = arith.extui %38 : i1 to i32
    %c0_i32_21 = arith.constant 0 : i32
    %40 = arith.cmpi ne, %39, %c0_i32_21 : i32
    scf.if %40 {
      %cst_26 = arith.constant 0.000000e+00 : f32
      %44 = vector.broadcast %cst_26 : f32 to vector<32x6xf32>
      %c0_27 = arith.constant 0 : index
      %c0_28 = arith.constant 0 : index
      %45 = vector.load %arg6[%c0_27, %c0_28] : memref<32x6xf32, #tpu.memory_space<vmem>>, vector<32x6xf32>
      tpu.vector_store %arg6[%c0_27, %c0_28], %44 {strides = array<i32>} : memref<32x6xf32, #tpu.memory_space<vmem>>, vector<32x6xf32>,
    } else {
    }
    %c0_22 = arith.constant 0 : index
    %c0_23 = arith.constant 0 : index
    %41 = vector.load %arg6[%c0_22, %c0_23] : memref<32x6xf32, #tpu.memory_space<vmem>>, vector<32x6xf32>
    %42 = arith.addf %41, %37 : vector<32x6xf32>
    %c0_24 = arith.constant 0 : index
    %c0_25 = arith.constant 0 : index
    %43 = vector.load %arg6[%c0_24, %c0_25] : memref<32x6xf32, #tpu.memory_space<vmem>>, vector<32x6xf32>
    tpu.vector_store %arg6[%c0_24, %c0_25], %42 {strides = array<i32>} : memref<32x6xf32, #tpu.memory_space<vmem>>, vector<32x6xf32>,
    return
  }
  func.func @transform_0(%arg0: i32) -> i32 {
    %c0_i32 = arith.constant 0 : i32
    %c0_i32_0 = arith.constant 0 : i32
    return %c0_i32 : i32
  }
  func.func @transform_1(%arg0: i32) -> (i32, i32, i32) {
    %c0_i32 = arith.constant 0 : i32
    %c0_i32_0 = arith.constant 0 : i32
    %c0_i32_1 = arith.constant 0 : i32
    return %c0_i32, %arg0, %c0_i32_0 : i32, i32, i32
  }
  func.func @transform_2(%arg0: i32) -> (i32, i32) {
    %c0_i32 = arith.constant 0 : i32
    %c0_i32_0 = arith.constant 0 : i32
    return %arg0, %c0_i32 : i32, i32
  }
  func.func @transform_3(%arg0: i32) -> (i32, i32) {
    %c0_i32 = arith.constant 0 : i32
    %c0_i32_0 = arith.constant 0 : i32
    return %c0_i32, %arg0 : i32, i32
  }
  func.func @transform_4(%arg0: i32) -> (i32, i32) {
    %c0_i32 = arith.constant 0 : i32
    %c0_i32_0 = arith.constant 0 : i32
    return %arg0, %c0_i32 : i32, i32
  }
  func.func @transform_5(%arg0: i32) -> (i32, i32) {
    %c0_i32 = arith.constant 0 : i32
    %c0_i32_0 = arith.constant 0 : i32
    %c0_i32_1 = arith.constant 0 : i32
    return %c0_i32, %c0_i32_0 : i32, i32
  }
}

module attributes {stable_mosaic.version = 11 : i64} {
  func.func @kernel(%arg0: memref<32x32xf32, #tpu.memory_space<vmem>>, %arg1: memref<32x4xf32, #tpu.memory_space<vmem>>, %arg2: memref<30x30xf32, #tpu.memory_space<vmem>>, %arg3: memref<30x4xf32, #tpu.memory_space<vmem>>, %arg4: memref<1x30xi32, #tpu.memory_space<vmem>>, %arg5: memref<4x32xf32, #tpu.memory_space<vmem>>, %arg6: memref<1x32xf32, #tpu.memory_space<vmem>>, %arg7: memref<32x32xf32, #tpu.memory_space<vmem>>, %arg8: memref<1x32xf32, #tpu.memory_space<vmem>>, %arg9: memref<32x32xf32, #tpu.memory_space<vmem>>, %arg10: memref<8x32xf32, #tpu.memory_space<vmem>>) attributes {dimension_semantics = [], scalar_prefetch = 0 : i64, scratch_operands = 0 : i64, tpu.core_type = #tpu.core_type<tc>} {
    %c0 = arith.constant 0 : index
    %c0_0 = arith.constant 0 : index
    %0 = vector.load %arg1[%c0, %c0_0] : memref<32x4xf32, #tpu.memory_space<vmem>>, vector<32x4xf32>
    %c0_1 = arith.constant 0 : index
    %c0_2 = arith.constant 0 : index
    %1 = vector.load %arg5[%c0_1, %c0_2] : memref<4x32xf32, #tpu.memory_space<vmem>>, vector<4x32xf32>
    %cst = arith.constant dense<0.000000e+00> : vector<32x32xf32>
    %2 = tpu.matmul %0, %1, %cst {dimension_numbers = #tpu.dot_dimension_numbers<[1], [0], [0], [1], [0, 0, 1, 1], [], []>} : vector<32x4xf32>, vector<4x32xf32>, vector<32x32xf32> -> vector<32x32xf32>
    %c0_3 = arith.constant 0 : index
    %c0_4 = arith.constant 0 : index
    %3 = vector.load %arg6[%c0_3, %c0_4] : memref<1x32xf32, #tpu.memory_space<vmem>>, vector<1x32xf32>
    %4 = vector.broadcast %3 : vector<1x32xf32> to vector<32x32xf32>
    %5 = arith.addf %2, %4 : vector<32x32xf32>
    %c0_5 = arith.constant 0 : index
    %c0_6 = arith.constant 0 : index
    %6 = vector.load %arg3[%c0_5, %c0_6] : memref<30x4xf32, #tpu.memory_space<vmem>>, vector<30x4xf32>
    %c0_7 = arith.constant 0 : index
    %c0_8 = arith.constant 0 : index
    %7 = vector.load %arg5[%c0_7, %c0_8] : memref<4x32xf32, #tpu.memory_space<vmem>>, vector<4x32xf32>
    %cst_9 = arith.constant dense<0.000000e+00> : vector<30x32xf32>
    %8 = tpu.matmul %6, %7, %cst_9 {dimension_numbers = #tpu.dot_dimension_numbers<[1], [0], [0], [1], [0, 0, 1, 1], [], []>} : vector<30x4xf32>, vector<4x32xf32>, vector<30x32xf32> -> vector<30x32xf32>
    %c0_10 = arith.constant 0 : index
    %c0_11 = arith.constant 0 : index
    %9 = vector.load %arg6[%c0_10, %c0_11] : memref<1x32xf32, #tpu.memory_space<vmem>>, vector<1x32xf32>
    %10 = vector.broadcast %9 : vector<1x32xf32> to vector<30x32xf32>
    %11 = arith.addf %8, %10 : vector<30x32xf32>
    %c0_12 = arith.constant 0 : index
    %c0_13 = arith.constant 0 : index
    %12 = vector.load %arg0[%c0_12, %c0_13] : memref<32x32xf32, #tpu.memory_space<vmem>>, vector<32x32xf32>
    %cst_14 = arith.constant dense<0.000000e+00> : vector<32x32xf32>
    %13 = tpu.matmul %12, %5, %cst_14 {dimension_numbers = #tpu.dot_dimension_numbers<[1], [0], [0], [1], [0, 0, 1, 1], [], []>} : vector<32x32xf32>, vector<32x32xf32>, vector<32x32xf32> -> vector<32x32xf32>
    %c0_15 = arith.constant 0 : index
    %c0_16 = arith.constant 0 : index
    %14 = vector.load %arg7[%c0_15, %c0_16] : memref<32x32xf32, #tpu.memory_space<vmem>>, vector<32x32xf32>
    %cst_17 = arith.constant dense<0.000000e+00> : vector<32x32xf32>
    %15 = tpu.matmul %13, %14, %cst_17 {dimension_numbers = #tpu.dot_dimension_numbers<[1], [0], [0], [1], [0, 0, 1, 1], [], []>} : vector<32x32xf32>, vector<32x32xf32>, vector<32x32xf32> -> vector<32x32xf32>
    %c0_18 = arith.constant 0 : index
    %c0_19 = arith.constant 0 : index
    %16 = vector.load %arg8[%c0_18, %c0_19] : memref<1x32xf32, #tpu.memory_space<vmem>>, vector<1x32xf32>
    %17 = vector.broadcast %16 : vector<1x32xf32> to vector<32x32xf32>
    %18 = arith.addf %15, %17 : vector<32x32xf32>
    %19 = arith.mulf %18, %18 : vector<32x32xf32>
    %cst_20 = arith.constant dense<0.000000e+00> : vector<32xf32>
    %20 = vector.multi_reduction <add>, %19, %cst_20 [1] : vector<32x32xf32> to vector<32xf32>
    %21 = vector.shape_cast %20 : vector<32xf32> to vector<32x1xf32>
    %cst_21 = arith.constant 1.000000e-24 : f32
    %22 = vector.broadcast %cst_21 : f32 to vector<32x1xf32>
    %23 = arith.maximumf %21, %22 : vector<32x1xf32>
    %24 = math.rsqrt %23 : vector<32x1xf32>
    %25 = vector.broadcast %24 : vector<32x1xf32> to vector<32x32xf32>
    %26 = arith.mulf %18, %25 : vector<32x32xf32>
    %c0_22 = arith.constant 0 : index
    %c0_23 = arith.constant 0 : index
    %27 = vector.load %arg9[%c0_22, %c0_23] : memref<32x32xf32, #tpu.memory_space<vmem>>, vector<32x32xf32>
    tpu.vector_store %arg9[%c0_22, %c0_23], %26 {strides = array<i32>} : memref<32x32xf32, #tpu.memory_space<vmem>>, vector<32x32xf32>,
    %c0_24 = arith.constant 0 : index
    %c0_25 = arith.constant 0 : index
    %28 = vector.load %arg2[%c0_24, %c0_25] : memref<30x30xf32, #tpu.memory_space<vmem>>, vector<30x30xf32>
    %cst_26 = arith.constant dense<0.000000e+00> : vector<30x32xf32>
    %29 = tpu.matmul %28, %11, %cst_26 {dimension_numbers = #tpu.dot_dimension_numbers<[1], [0], [0], [1], [0, 0, 1, 1], [], []>} : vector<30x30xf32>, vector<30x32xf32>, vector<30x32xf32> -> vector<30x32xf32>
    %c0_27 = arith.constant 0 : index
    %c0_28 = arith.constant 0 : index
    %30 = vector.load %arg7[%c0_27, %c0_28] : memref<32x32xf32, #tpu.memory_space<vmem>>, vector<32x32xf32>
    %cst_29 = arith.constant dense<0.000000e+00> : vector<30x32xf32>
    %31 = tpu.matmul %29, %30, %cst_29 {dimension_numbers = #tpu.dot_dimension_numbers<[1], [0], [0], [1], [0, 0, 1, 1], [], []>} : vector<30x32xf32>, vector<32x32xf32>, vector<30x32xf32> -> vector<30x32xf32>
    %c0_30 = arith.constant 0 : index
    %c0_31 = arith.constant 0 : index
    %32 = vector.load %arg8[%c0_30, %c0_31] : memref<1x32xf32, #tpu.memory_space<vmem>>, vector<1x32xf32>
    %33 = vector.broadcast %32 : vector<1x32xf32> to vector<30x32xf32>
    %34 = arith.addf %31, %33 : vector<30x32xf32>
    %35 = tpu.iota {dimensions = array<i32: 0>} : vector<8x30xi32>
    %c0_32 = arith.constant 0 : index
    %c0_33 = arith.constant 0 : index
    %36 = vector.load %arg4[%c0_32, %c0_33] : memref<1x30xi32, #tpu.memory_space<vmem>>, vector<1x30xi32>
    %37 = vector.broadcast %36 : vector<1x30xi32> to vector<8x30xi32>
    %38 = arith.cmpi eq, %35, %37 : vector<8x30xi32>
    %cst_34 = arith.constant 1.000000e+00 : f32
    %cst_35 = arith.constant 0.000000e+00 : f32
    %39 = vector.broadcast %cst_34 : f32 to vector<8x30xf32>
    %40 = vector.broadcast %cst_35 : f32 to vector<8x30xf32>
    %41 = arith.select %38, %39, %40 : vector<8x30xi1>, vector<8x30xf32>
    %cst_36 = arith.constant dense<0.000000e+00> : vector<8xf32>
    %42 = vector.multi_reduction <add>, %41, %cst_36 [1] : vector<8x30xf32> to vector<8xf32>
    %43 = vector.shape_cast %42 : vector<8xf32> to vector<8x1xf32>
    %cst_37 = arith.constant 1.000000e+00 : f32
    %44 = vector.broadcast %cst_37 : f32 to vector<8x1xf32>
    %45 = arith.maximumf %43, %44 : vector<8x1xf32>
    %cst_38 = arith.constant dense<0.000000e+00> : vector<8x32xf32>
    %46 = tpu.matmul %41, %34, %cst_38 {dimension_numbers = #tpu.dot_dimension_numbers<[1], [0], [0], [1], [0, 0, 1, 1], [], []>} : vector<8x30xf32>, vector<30x32xf32>, vector<8x32xf32> -> vector<8x32xf32>
    %47 = vector.broadcast %45 : vector<8x1xf32> to vector<8x32xf32>
    %48 = arith.divf %46, %47 : vector<8x32xf32>
    %49 = arith.mulf %48, %48 : vector<8x32xf32>
    %cst_39 = arith.constant dense<0.000000e+00> : vector<8xf32>
    %50 = vector.multi_reduction <add>, %49, %cst_39 [1] : vector<8x32xf32> to vector<8xf32>
    %51 = vector.shape_cast %50 : vector<8xf32> to vector<8x1xf32>
    %cst_40 = arith.constant 1.000000e-24 : f32
    %52 = vector.broadcast %cst_40 : f32 to vector<8x1xf32>
    %53 = arith.maximumf %51, %52 : vector<8x1xf32>
    %54 = math.rsqrt %53 : vector<8x1xf32>
    %55 = vector.broadcast %54 : vector<8x1xf32> to vector<8x32xf32>
    %56 = arith.mulf %48, %55 : vector<8x32xf32>
    %c0_41 = arith.constant 0 : index
    %c0_42 = arith.constant 0 : index
    %57 = vector.load %arg10[%c0_41, %c0_42] : memref<8x32xf32, #tpu.memory_space<vmem>>, vector<8x32xf32>
    tpu.vector_store %arg10[%c0_41, %c0_42], %56 {strides = array<i32>} : memref<8x32xf32, #tpu.memory_space<vmem>>, vector<8x32xf32>,
    return
  }
}

</mosaic_0001>

<llo_original>
// kernel: seggcn_stage1.2
$region0: #{seggcn_stage1.2}
  #allocation0 [shape = 'u32[]', space=smem, size = 0x4, offset = 0x4, fixed_abs, tag = 'smem constant byte address 0x4 - core index']
  #allocation1 [shape = 'u32[144,128]{1,0:T(1,128)}', space=vmem, size = 0x12000, scoped, tag = 'internal scratch']
  %s0 = inlined_call_operand.vmem [shape: f32[5], index: 0, kind: input, shape index: {}]
  %s1 = inlined_call_operand.vmem [shape: f32[4,4,128], index: 1, kind: input, shape index: {}]
  %s2 = inlined_call_operand.vmem [shape: f32[512,6], index: 2, kind: input, shape index: {}]
  %s3 = inlined_call_operand.vmem [shape: s32[1,512], index: 3, kind: input, shape index: {}]
  %s4 = inlined_call_operand.vmem [shape: f32[4,128], index: 4, kind: output, shape index: {0}]
  %s5 = inlined_call_operand.vmem [shape: f32[32,6], index: 5, kind: output, shape index: {1}]
  %6 = xla_tuple %s4, %s5
  %s7 = sld [smem:[#allocation0]]
  $region42: #{seggcn_stage1.2} parent=0
    _
  %s9 = ssub.s32 1, %s7
  %s10 = scalar_select 0, %s9, %s7
  $region1: #{seggcn_stage1.2} parent=0
    #allocation2 [shape = 'u8[512]{0}', space=smem, size = 0x200, scoped, tag = 'input window, operand 0, single buffered']
    #allocation3 [shape = 's32[1]{0}', space=sflag, size = 0x4, scoped, tag = 'scoped memory for seggcn_stage1.2']
    %11 = vsyncpa [#allocation3], 0
    // Predicated region
    $region2: #{seggcn_stage1.2} parent=1 // pred_check
      _
    $region3: #{seggcn_stage1.2} parent=1 // pred_check_branch
      %13 = sbr.rel (0) target = $region5
    $region4: #{seggcn_stage1.2} parent=1 // pred_region
      %s15 = ssub.s32 16, 16
      %16 = vsyncadd [#allocation3], %s15
      %s18 = sshll.u32 %s0, 4
      %s19 = int_to_ptr.vmem [resolvable:$true] %s18
      %21 = dma.vmem_to_smem %s19, 16, [#allocation2], [#allocation3]
    $region5: #{seggcn_stage1.2} parent=1 // pred_fallthru
      _
    // Predicated region
    $region6: #{seggcn_stage1.2} parent=1 // pred_check
      _
    $region7: #{seggcn_stage1.2} parent=1 // pred_check_branch
      %23 = sbr.rel (0) target = $region9
    $region8: #{seggcn_stage1.2} parent=1 // pred_region
      _
    $region9: #{seggcn_stage1.2} parent=1 // pred_fallthru
      _
    // Predicated region
    $region10: #{seggcn_stage1.2} parent=1 // pred_check
      _
    $region11: #{seggcn_stage1.2} parent=1 // pred_check_branch
      %25 = sbr.rel (0) target = $region13
    $region12: #{seggcn_stage1.2} parent=1 // pred_region
      _
    $region13: #{seggcn_stage1.2} parent=1 // pred_fallthru
      _
    // Predicated region
    $region14: #{seggcn_stage1.2} parent=1 // pred_check
      _
    $region15: #{seggcn_stage1.2} parent=1 // pred_check_branch
      %27 = sbr.rel (0) target = $region17
    $region16: #{seggcn_stage1.2} parent=1 // pred_region
      _
    $region17: #{seggcn_stage1.2} parent=1 // pred_fallthru
      _
    // Predicated region
    $region18: #{seggcn_stage1.2} parent=1 // pred_check
      _
    $region19: #{seggcn_stage1.2} parent=1 // pred_check_branch
      %29 = sbr.rel (0) target = $region21
    $region20: #{seggcn_stage1.2} parent=1 // pred_region
      %30 = dma.done [#allocation3], 16
    $region21: #{seggcn_stage1.2} parent=1 // pred_fallthru
      _
    %31 = sfence
    %s32 = sld [smem:[#allocation2 + $0x4]]
    %v33 = vstv %s32
    %v34 = vadd.f32 %v33, 0.0
    %s35 = sld [smem:[#allocation2]]
    %v36 = vld [vmem:[%s1] sm:$0xf]
    %v37 = vstv %s35
    %v38 = vmul.f32 %v37, %v36
    %v39 = vadd.f32 %v34, %v38
    %s40 = sld [smem:[#allocation2 + $0x1]]
    %s41 = scalar_lea.vmem %s1, 4
    %v42 = vld [vmem:[%s41] sm:$0xf]
    %v43 = vstv %s40
    %v44 = vmul.f32 %v43, %v42
    %v45 = vadd.f32 %v39, %v44
    %s46 = sld [smem:[#allocation2 + $0x2]]
    %s47 = scalar_lea.vmem %s1, 8
    %v48 = vld [vmem:[%s47] sm:$0xf]
    %v49 = vstv %s46
    %v50 = vmul.f32 %v49, %v48
    %v51 = vadd.f32 %v45, %v50
    %s52 = sld [smem:[#allocation2 + $0x3]]
    %s53 = scalar_lea.vmem %s1, 12
    %v54 = vld [vmem:[%s53] sm:$0xf]
    %v55 = vstv %s52
    %v56 = vmul.f32 %v55, %v54
    %v57 = vadd.f32 %v51, %v56
    %58 = vst [vmem:[%s4] sm:$0xf] %v57
    %v59 = vld [vmem:[%s3] sm:$0xf]
    %v60 = vlaneseq
    %v61 = vshrl.u32 %v60, 7
    %v62 = vadd.s32 %v61, 8
    %v63 = vadd.s32 %v61, 16
    %v64 = vadd.s32 %v61, 24
    %v65 = vlaneseq
    %v66 = vshrl.u32 %v65, 7
    %v67 = vsub.s32 0, %v66
    %v68 = vrot.slane %v59, %v67
    %v69 = vlaneseq
    %v70 = vshrl.u32 %v69, 7
    %v71 = vsub.s32 1, %v70
    %v72 = vrot.slane %v59, %v71
    %v73 = vlaneseq
    %v74 = vshrl.u32 %v73, 7
    %v75 = vsub.s32 2, %v74
    %v76 = vrot.slane %v59, %v75
    %v77 = vlaneseq
    %v78 = vshrl.u32 %v77, 7
    %v79 = vsub.s32 3, %v78
    %v80 = vrot.slane %v59, %v79
    %vm81 = vcmp.eq.s32.totalorder %v61, %v68
    %vm82 = vcmp.eq.s32.totalorder %v61, %v72
    %vm83 = vcmp.eq.s32.totalorder %v61, %v76
    %vm84 = vcmp.eq.s32.totalorder %v61, %v80
    %vm85 = vcmp.eq.s32.totalorder %v62, %v68
    %vm86 = vcmp.eq.s32.totalorder %v62, %v72
    %vm87 = vcmp.eq.s32.totalorder %v62, %v76
    %vm88 = vcmp.eq.s32.totalorder %v62, %v80
    %vm89 = vcmp.eq.s32.totalorder %v63, %v68
    %vm90 = vcmp.eq.s32.totalorder %v63, %v72
    %vm91 = vcmp.eq.s32.totalorder %v63, %v76
    %vm92 = vcmp.eq.s32.totalorder %v63, %v80
    %vm93 = vcmp.eq.s32.totalorder %v64, %v68
    %vm94 = vcmp.eq.s32.totalorder %v64, %v72
    %vm95 = vcmp.eq.s32.totalorder %v64, %v76
    %vm96 = vcmp.eq.s32.totalorder %v64, %v80
    %v97 = vsel %vm81, 1.0, 0.0
    %v98 = vsel %vm82, 1.0, 0.0
    %v99 = vsel %vm83, 1.0, 0.0
    %v100 = vsel %vm84, 1.0, 0.0
    %v101 = vsel %vm85, 1.0, 0.0
    %v102 = vsel %vm86, 1.0, 0.0
    %v103 = vsel %vm87, 1.0, 0.0
    %v104 = vsel %vm88, 1.0, 0.0
    %v105 = vsel %vm89, 1.0, 0.0
    %v106 = vsel %vm90, 1.0, 0.0
    %v107 = vsel %vm91, 1.0, 0.0
    %v108 = vsel %vm92, 1.0, 0.0
    %v109 = vsel %vm93, 1.0, 0.0
    %v110 = vsel %vm94, 1.0, 0.0
    %v111 = vsel %vm95, 1.0, 0.0
    %v112 = vsel %vm96, 1.0, 0.0
    %v113 = vld [vmem:[%s2] sm:$0xff]
    %v114 = vld [vmem:[%s2 + $0x8] sm:$0xff]
    %v115 = vld [vmem:[%s2 + $0x10] sm:$0xff]
    %v116 = vld [vmem:[%s2 + $0x18] sm:$0xff]
    %v117 = vld [vmem:[%s2 + $0x20] sm:$0xff]
    %v118 = vld [vmem:[%s2 + $0x28] sm:$0xff]
    %v119 = vld [vmem:[%s2 + $0x30] sm:$0xff]
    %v120 = vld [vmem:[%s2 + $0x38] sm:$0xff]
    %v121 = vld [vmem:[%s2 + $0x40] sm:$0xff]
    %v122 = vld [vmem:[%s2 + $0x48] sm:$0xff]
    %v123 = vld [vmem:[%s2 + $0x50] sm:$0xff]
    %v124 = vld [vmem:[%s2 + $0x58] sm:$0xff]
    %v125 = vld [vmem:[%s2 + $0x60] sm:$0xff]
    %v126 = vld [vmem:[%s2 + $0x68] sm:$0xff]
    %v127 = vld [vmem:[%s2 + $0x70] sm:$0xff]
    %v128 = vld [vmem:[%s2 + $0x78] sm:$0xff]
    %v129 = vld [vmem:[%s2 + $0x80] sm:$0xff]
    %v130 = vld [vmem:[%s2 + $0x88] sm:$0xff]
    %v131 = vld [vmem:[%s2 + $0x90] sm:$0xff]
    %v132 = vld [vmem:[%s2 + $0x98] sm:$0xff]
    %v133 = vld [vmem:[%s2 + $0xa0] sm:$0xff]
    %v134 = vld [vmem:[%s2 + $0xa8] sm:$0xff]
    %v135 = vld [vmem:[%s2 + $0xb0] sm:$0xff]
    %v136 = vld [vmem:[%s2 + $0xb8] sm:$0xff]
    %v137 = vld [vmem:[%s2 + $0xc0] sm:$0xff]
    %v138 = vld [vmem:[%s2 + $0xc8] sm:$0xff]
    %v139 = vld [vmem:[%s2 + $0xd0] sm:$0xff]
    %v140 = vld [vmem:[%s2 + $0xd8] sm:$0xff]
    %v141 = vld [vmem:[%s2 + $0xe0] sm:$0xff]
    %v142 = vld [vmem:[%s2 + $0xe8] sm:$0xff]
    %v143 = vld [vmem:[%s2 + $0xf0] sm:$0xff]
    %v144 = vld [vmem:[%s2 + $0xf8] sm:$0xff]
    %v145 = vld [vmem:[%s2 + $0x100] sm:$0xff]
    %v146 = vld [vmem:[%s2 + $0x108] sm:$0xff]
    %v147 = vld [vmem:[%s2 + $0x110] sm:$0xff]
    %v148 = vld [vmem:[%s2 + $0x118] sm:$0xff]
    %v149 = vld [vmem:[%s2 + $0x120] sm:$0xff]
    %v150 = vld [vmem:[%s2 + $0x128] sm:$0xff]
    %v151 = vld [vmem:[%s2 + $0x130] sm:$0xff]
    %v152 = vld [vmem:[%s2 + $0x138] sm:$0xff]
    %v153 = vld [vmem:[%s2 + $0x140] sm:$0xff]
    %v154 = vld [vmem:[%s2 + $0x148] sm:$0xff]
    %v155 = vld [vmem:[%s2 + $0x150] sm:$0xff]
    %v156 = vld [vmem:[%s2 + $0x158] sm:$0xff]
    %v157 = vld [vmem:[%s2 + $0x160] sm:$0xff]
    %v158 = vld [vmem:[%s2 + $0x168] sm:$0xff]
    %v159 = vld [vmem:[%s2 + $0x170] sm:$0xff]
    %v160 = vld [vmem:[%s2 + $0x178] sm:$0xff]
    %v161 = vld [vmem:[%s2 + $0x180] sm:$0xff]
    %v162 = vld [vmem:[%s2 + $0x188] sm:$0xff]
    %v163 = vld [vmem:[%s2 + $0x190] sm:$0xff]
    %v164 = vld [vmem:[%s2 + $0x198] sm:$0xff]
    %v165 = vld [vmem:[%s2 + $0x1a0] sm:$0xff]
    %v166 = vld [vmem:[%s2 + $0x1a8] sm:$0xff]
    %v167 = vld [vmem:[%s2 + $0x1b0] sm:$0xff]
    %v168 = vld [vmem:[%s2 + $0x1b8] sm:$0xff]
    %v169 = vld [vmem:[%s2 + $0x1c0] sm:$0xff]
    %v170 = vld [vmem:[%s2 + $0x1c8] sm:$0xff]
    %v171 = vld [vmem:[%s2 + $0x1d0] sm:$0xff]
    %v172 = vld [vmem:[%s2 + $0x1d8] sm:$0xff]
    %v173 = vld [vmem:[%s2 + $0x1e0] sm:$0xff]
    %v174 = vld [vmem:[%s2 + $0x1e8] sm:$0xff]
    %v175 = vld [vmem:[%s2 + $0x1f0] sm:$0xff]
    %v176 = vld [vmem:[%s2 + $0x1f8] sm:$0xff]
    %177 = vmatprep.subr.mxu0 0.0
    %178 = vmatpush1.msra.mxu0 %v113
    %179 = vmatprep.subr.mxu0 0.0
    %180 = vmatpush1.msra.mxu0 %v114
    %181 = vmatprep.subr.mxu0 0.0
    %182 = vmatpush1.msra.mxu0 %v115
    %183 = vmatprep.subr.mxu0 0.0
    %184 = vmatpush1.msra.mxu0 %v116
    %185 = vmatprep.subr.mxu0 0.0
    %186 = vmatpush1.msra.mxu0 %v117
    %187 = vmatprep.subr.mxu0 0.0
    %188 = vmatpush1.msra.mxu0 %v118
    %189 = vmatprep.subr.mxu0 0.0
    %190 = vmatpush1.msra.mxu0 %v119
    %191 = vmatprep.subr.mxu0 0.0
    %192 = vmatpush1.msra.mxu0 %v120
    %193 = vmatprep.subr.mxu0 0.0
    %194 = vmatpush1.msra.mxu0 %v121
    %195 = vmatprep.subr.mxu0 0.0
    %196 = vmatpush1.msra.mxu0 %v122
    %197 = vmatprep.subr.mxu0 0.0
    %198 = vmatpush1.msra.mxu0 %v123
    %199 = vmatprep.subr.mxu0 0.0
    %200 = vmatpush1.msra.mxu0 %v124
    %201 = vmatprep.subr.mxu0 0.0
    %202 = vmatpush1.msra.mxu0 %v125
    %203 = vmatprep.subr.mxu0 0.0
    %204 = vmatpush1.msra.mxu0 %v126
    %205 = vmatprep.subr.mxu0 0.0
    %206 = vmatpush1.msra.mxu0 %v127
    %207 = vmatprep.subr.mxu0 0.0
    %208 = vmatpush1.msra.mxu0 %v128
    %209 = vmatprep.subr.mxu0 0.0
    %210 = vmatpush1.msra.mxu0 %v129
    %211 = vmatprep.subr.mxu0 0.0
    %212 = vmatpush1.msra.mxu0 %v130
    %213 = vmatprep.subr.mxu0 0.0
    %214 = vmatpush1.msra.mxu0 %v131
    %215 = vmatprep.subr.mxu0 0.0
    %216 = vmatpush1.msra.mxu0 %v132
    %217 = vmatprep.subr.mxu0 0.0
    %218 = vmatpush1.msra.mxu0 %v133
    %219 = vmatprep.subr.mxu0 0.0
    %220 = vmatpush1.msra.mxu0 %v134
    %221 = vmatprep.subr.mxu0 0.0
    %222 = vmatpush1.msra.mxu0 %v135
    %223 = vmatprep.subr.mxu0 0.0
    %224 = vmatpush1.msra.mxu0 %v136
    %225 = vmatprep.subr.mxu0 0.0
    %226 = vmatpush1.msra.mxu0 %v137
    %227 = vmatprep.subr.mxu0 0.0
    %228 = vmatpush1.msra.mxu0 %v138
    %229 = vmatprep.subr.mxu0 0.0
    %230 = vmatpush1.msra.mxu0 %v139
    %231 = vmatprep.subr.mxu0 0.0
    %232 = vmatpush1.msra.mxu0 %v140
    %233 = vmatprep.subr.mxu0 0.0
    %234 = vmatpush1.msra.mxu0 %v141
    %235 = vmatprep.subr.mxu0 0.0
    %236 = vmatpush1.msra.mxu0 %v142
    %237 = vmatprep.subr.mxu0 0.0
    %238 = vmatpush1.msra.mxu0 %v143
    %239 = vmatprep.subr.mxu0 0.0
    %240 = vmatpush1.msra.mxu0 %v144
    %241 = vmatprep.mubr.f32.mxu0 %v98
    %242 = vmatmul.mubr.f32.gmra.mrb[0].mxu0 %v97
    %v243 = vpop.f32.mrb[0].mxu0
    %v244 = vadd.f32 0.0, %v243
    %v245 = vpop.f32.mrb[0].mxu0
    %246 = vmatprep.mubr.f32.mxu0 %v102
    %247 = vmatmul.mubr.f32.gmra.mrb[0].mxu0 %v101
    %v248 = vpop.f32.mrb[0].mxu0
    %v249 = vadd.f32 0.0, %v248
    %v250 = vpop.f32.mrb[0].mxu0
    %251 = vmatprep.mubr.f32.mxu0 %v106
    %252 = vmatmul.mubr.f32.gmra.mrb[0].mxu0 %v105
    %v253 = vpop.f32.mrb[0].mxu0
    %v254 = vadd.f32 0.0, %v253
    %v255 = vpop.f32.mrb[0].mxu0
    %256 = vmatprep.mubr.f32.mxu0 %v110
    %257 = vmatmul.mubr.f32.gmra.mrb[0].mxu0 %v109
    %v258 = vpop.f32.mrb[0].mxu0
    %v259 = vadd.f32 0.0, %v258
    %v260 = vpop.f32.mrb[0].mxu0
    %261 = vdwg.mxu0
    %262 = vmatprep.subr.mxu0 0.0
    %263 = vmatpush1.msra.mxu0 %v145
    %264 = vmatprep.subr.mxu0 0.0
    %265 = vmatpush1.msra.mxu0 %v146
    %266 = vmatprep.subr.mxu0 0.0
    %267 = vmatpush1.msra.mxu0 %v147
    %268 = vmatprep.subr.mxu0 0.0
    %269 = vmatpush1.msra.mxu0 %v148
    %270 = vmatprep.subr.mxu0 0.0
    %271 = vmatpush1.msra.mxu0 %v149
    %272 = vmatprep.subr.mxu0 0.0
    %273 = vmatpush1.msra.mxu0 %v150
    %274 = vmatprep.subr.mxu0 0.0
    %275 = vmatpush1.msra.mxu0 %v151
    %276 = vmatprep.subr.mxu0 0.0
    %277 = vmatpush1.msra.mxu0 %v152
    %278 = vmatprep.subr.mxu0 0.0
    %279 = vmatpush1.msra.mxu0 %v153
    %280 = vmatprep.subr.mxu0 0.0
    %281 = vmatpush1.msra.mxu0 %v154
    %282 = vmatprep.subr.mxu0 0.0
    %283 = vmatpush1.msra.mxu0 %v155
    %284 = vmatprep.subr.mxu0 0.0
    %285 = vmatpush1.msra.mxu0 %v156
    %286 = vmatprep.subr.mxu0 0.0
    %287 = vmatpush1.msra.mxu0 %v157
    %288 = vmatprep.subr.mxu0 0.0
    %289 = vmatpush1.msra.mxu0 %v158
    %290 = vmatprep.subr.mxu0 0.0
    %291 = vmatpush1.msra.mxu0 %v159
    %292 = vmatprep.subr.mxu0 0.0
    %293 = vmatpush1.msra.mxu0 %v160
    %294 = vmatprep.subr.mxu0 0.0
    %295 = vmatpush1.msra.mxu0 %v161
    %296 = vmatprep.subr.mxu0 0.0
    %297 = vmatpush1.msra.mxu0 %v162
    %298 = vmatprep.subr.mxu0 0.0
    %299 = vmatpush1.msra.mxu0 %v163
    %300 = vmatprep.subr.mxu0 0.0
    %301 = vmatpush1.msra.mxu0 %v164
    %302 = vmatprep.subr.mxu0 0.0
    %303 = vmatpush1.msra.mxu0 %v165
    %304 = vmatprep.subr.mxu0 0.0
    %305 = vmatpush1.msra.mxu0 %v166
    %306 = vmatprep.subr.mxu0 0.0
    %307 = vmatpush1.msra.mxu0 %v167
    %308 = vmatprep.subr.mxu0 0.0
    %309 = vmatpush1.msra.mxu0 %v168
    %310 = vmatprep.subr.mxu0 0.0
    %311 = vmatpush1.msra.mxu0 %v169
    %312 = vmatprep.subr.mxu0 0.0
    %313 = vmatpush1.msra.mxu0 %v170
    %314 = vmatprep.subr.mxu0 0.0
    %315 = vmatpush1.msra.mxu0 %v171
    %316 = vmatprep.subr.mxu0 0.0
    %317 = vmatpush1.msra.mxu0 %v172
    %318 = vmatprep.subr.mxu0 0.0
    %319 = vmatpush1.msra.mxu0 %v173
    %320 = vmatprep.subr.mxu0 0.0
    %321 = vmatpush1.msra.mxu0 %v174
    %322 = vmatprep.subr.mxu0 0.0
    %323 = vmatpush1.msra.mxu0 %v175
    %324 = vmatprep.subr.mxu0 0.0
    %325 = vmatpush1.msra.mxu0 %v176
    %326 = vmatprep.mubr.f32.mxu0 %v100
    %327 = vmatmul.mubr.f32.gmra.mrb[0].mxu0 %v99
    %v328 = vpop.f32.mrb[0].mxu0
    %v329 = vadd.f32 %v244, %v328
    %v330 = vpop.f32.mrb[0].mxu0
    %331 = vmatprep.mubr.f32.mxu0 %v104
    %332 = vmatmul.mubr.f32.gmra.mrb[0].mxu0 %v103
    %v333 = vpop.f32.mrb[0].mxu0
    %v334 = vadd.f32 %v249, %v333
    %v335 = vpop.f32.mrb[0].mxu0
    %336 = vmatprep.mubr.f32.mxu0 %v108
    %337 = vmatmul.mubr.f32.gmra.mrb[0].mxu0 %v107
    %v338 = vpop.f32.mrb[0].mxu0
    %v339 = vadd.f32 %v254, %v338
    %v340 = vpop.f32.mrb[0].mxu0
    %341 = vmatprep.mubr.f32.mxu0 %v112
    %342 = vmatmul.mubr.f32.gmra.mrb[0].mxu0 %v111
    %v343 = vpop.f32.mrb[0].mxu0
    %v344 = vadd.f32 %v259, %v343
    %v345 = vpop.f32.mrb[0].mxu0
    %346 = vdwg.mxu0
    %p347 = scmp.eq.s32.totalorder 0, 0
    // Predicated region
    $region22: #{seggcn_stage1.2} parent=1 // pred_check
      %p348 = pneg %p347
    $region23: #{seggcn_stage1.2} parent=1 // pred_check_branch
      %350 = sbr.rel (%p348) target = $region25
    $region24: #{seggcn_stage1.2} parent=1 // pred_region
      %vm351 = vcmask 48128
      %352 = vst.msk [vmem:[%s5] sm:$0xff] %vm351, 0.0
      %353 = vst.msk [vmem:[%s5 + $0x8] sm:$0xff] %vm351, 0.0
      %354 = vst.msk [vmem:[%s5 + $0x10] sm:$0xff] %vm351, 0.0
      %355 = vst.msk [vmem:[%s5 + $0x18] sm:$0xff] %vm351, 0.0
    $region25: #{seggcn_stage1.2} parent=1 // pred_fallthru
      _
    %v356 = vld [vmem:[%s5] sm:$0xff]
    %v357 = vld [vmem:[%s5 + $0x8] sm:$0xff]
    %v358 = vld [vmem:[%s5 + $0x10] sm:$0xff]
    %v359 = vld [vmem:[%s5 + $0x18] sm:$0xff]
    %v360 = vadd.f32 %v356, %v329
    %v361 = vadd.f32 %v357, %v334
    %v362 = vadd.f32 %v358, %v339
    %v363 = vadd.f32 %v359, %v344
    %vm364 = vcmask 48128
    %365 = vst.msk [vmem:[%s5] sm:$0xff] %vm364, %v360
    %366 = vst.msk [vmem:[%s5 + $0x8] sm:$0xff] %vm364, %v361
    %367 = vst.msk [vmem:[%s5 + $0x10] sm:$0xff] %vm364, %v362
    %368 = vst.msk [vmem:[%s5 + $0x18] sm:$0xff] %vm364, %v363
    // Predicated region
    $region26: #{seggcn_stage1.2} parent=1 // pred_check
      _
    $region27: #{seggcn_stage1.2} parent=1 // pred_check_branch
      %370 = sbr.rel (0) target = $region29
    $region28: #{seggcn_stage1.2} parent=1 // pred_region
      _
    $region29: #{seggcn_stage1.2} parent=1 // pred_fallthru
      _
    // Predicated region
    $region30: #{seggcn_stage1.2} parent=1 // pred_check
      _
    $region31: #{seggcn_stage1.2} parent=1 // pred_check_branch
      %372 = sbr.rel (0) target = $region33
    $region32: #{seggcn_stage1.2} parent=1 // pred_region
      _
    $region33: #{seggcn_stage1.2} parent=1 // pred_fallthru
      _
    // Predicated region
    $region34: #{seggcn_stage1.2} parent=1 // pred_check
      _
    $region35: #{seggcn_stage1.2} parent=1 // pred_check_branch
      %374 = sbr.rel (0) target = $region37
    $region36: #{seggcn_stage1.2} parent=1 // pred_region
      _
    $region37: #{seggcn_stage1.2} parent=1 // pred_fallthru
      _
    // Predicated region
    $region38: #{seggcn_stage1.2} parent=1 // pred_check
      _
    $region39: #{seggcn_stage1.2} parent=1 // pred_check_branch
      %376 = sbr.rel (0) target = $region41
    $region40: #{seggcn_stage1.2} parent=1 // pred_region
      _
    $region41: #{seggcn_stage1.2} parent=1 // pred_fallthru
      _
    %377 = vsyncpa [#allocation3], 1

// kernel: seggcn_stage1.3
$region0: #{seggcn_stage1.3}
  #allocation0 [shape = 'u32[]', space=smem, size = 0x4, offset = 0x4, fixed_abs, tag = 'smem constant byte address 0x4 - core index']
  #allocation1 [shape = 'u32[144,128]{1,0:T(1,128)}', space=vmem, size = 0x12000, scoped, tag = 'internal scratch']
  %s0 = inlined_call_operand.vmem [shape: f32[32,32], index: 0, kind: input, shape index: {}]
  %s1 = inlined_call_operand.vmem [shape: f32[32,4], index: 1, kind: input, shape index: {}]
  %s2 = inlined_call_operand.vmem [shape: f32[30,30], index: 2, kind: input, shape index: {}]
  %s3 = inlined_call_operand.vmem [shape: f32[30,4], index: 3, kind: input, shape index: {}]
  %s4 = inlined_call_operand.vmem [shape: s32[1,30], index: 4, kind: input, shape index: {}]
  %s5 = inlined_call_operand.vmem [shape: f32[4,32], index: 5, kind: input, shape index: {}]
  %s6 = inlined_call_operand.vmem [shape: f32[1,32], index: 6, kind: input, shape index: {}]
  %s7 = inlined_call_operand.vmem [shape: f32[32,32], index: 7, kind: input, shape index: {}]
  %s8 = inlined_call_operand.vmem [shape: f32[1,32], index: 8, kind: input, shape index: {}]
  %s9 = inlined_call_operand.hbm [shape: f32[32,32], index: 9, kind: output, shape index: {0}]
  %s10 = inlined_call_operand.vmem [shape: f32[8,32], index: 10, kind: output, shape index: {1}]
  %11 = xla_tuple %s9, %s10
  %s12 = sld [smem:[#allocation0]]
  $region54: #{seggcn_stage1.3} parent=0
    _
  %s14 = ssub.s32 1, %s12
  %s15 = scalar_select 0, %s14, %s12
  $region1: #{seggcn_stage1.3} parent=0
    #allocation2 [shape = 'u8[16384]{0}', space=vmem, size = 0x4000, scoped, tag = 'output window, operand 0, single buffered']
    #allocation3 [shape = 's32[1]{0}', space=sflag, size = 0x4, scoped, tag = 'scoped memory for seggcn_stage1.3']
    %16 = vsyncpa [#allocation3], 0
    // Predicated region
    $region2: #{seggcn_stage1.3} parent=1 // pred_check
      _
    $region3: #{seggcn_stage1.3} parent=1 // pred_check_branch
      %18 = sbr.rel (0) target = $region5
    $region4: #{seggcn_stage1.3} parent=1 // pred_region
      _
    $region5: #{seggcn_stage1.3} parent=1 // pred_fallthru
      _
    // Predicated region
    $region6: #{seggcn_stage1.3} parent=1 // pred_check
      _
    $region7: #{seggcn_stage1.3} parent=1 // pred_check_branch
      %20 = sbr.rel (0) target = $region9
    $region8: #{seggcn_stage1.3} parent=1 // pred_region
      _
    $region9: #{seggcn_stage1.3} parent=1 // pred_fallthru
      _
    // Predicated region
    $region10: #{seggcn_stage1.3} parent=1 // pred_check
      _
    $region11: #{seggcn_stage1.3} parent=1 // pred_check_branch
      %22 = sbr.rel (0) target = $region13
    $region12: #{seggcn_stage1.3} parent=1 // pred_region
      _
    $region13: #{seggcn_stage1.3} parent=1 // pred_fallthru
      _
    // Predicated region
    $region14: #{seggcn_stage1.3} parent=1 // pred_check
      _
    $region15: #{seggcn_stage1.3} parent=1 // pred_check_branch
      %24 = sbr.rel (0) target = $region17
    $region16: #{seggcn_stage1.3} parent=1 // pred_region
      _
    $region17: #{seggcn_stage1.3} parent=1 // pred_fallthru
      _
    // Predicated region
    $region18: #{seggcn_stage1.3} parent=1 // pred_check
      _
    $region19: #{seggcn_stage1.3} parent=1 // pred_check_branch
      %26 = sbr.rel (0) target = $region21
    $region20: #{seggcn_stage1.3} parent=1 // pred_region
      _
    $region21: #{seggcn_stage1.3} parent=1 // pred_fallthru
      _
    // Predicated region
    $region22: #{seggcn_stage1.3} parent=1 // pred_check
      _
    $region23: #{seggcn_stage1.3} parent=1 // pred_check_branch
      %28 = sbr.rel (0) target = $region25
    $region24: #{seggcn_stage1.3} parent=1 // pred_region
      _
    $region25: #{seggcn_stage1.3} parent=1 // pred_fallthru
      _
    // Predicated region
    $region26: #{seggcn_stage1.3} parent=1 // pred_check
      _
    $region27: #{seggcn_stage1.3} parent=1 // pred_check_branch
      %30 = sbr.rel (0) target = $region29
    $region28: #{seggcn_stage1.3} parent=1 // pred_region
      _
    $region29: #{seggcn_stage1.3} parent=1 // pred_fallthru
      _
    // Predicated region
    $region30: #{seggcn_stage1.3} parent=1 // pred_check
      _
    $region31: #{seggcn_stage1.3} parent=1 // pred_check_branch
      %32 = sbr.rel (0) target = $region33
    $region32: #{seggcn_stage1.3} parent=1 // pred_region
      _
    $region33: #{seggcn_stage1.3} parent=1 // pred_fallthru
      _
    // Predicated region
    $region34: #{seggcn_stage1.3} parent=1 // pred_check
      _
    $region35: #{seggcn_stage1.3} parent=1 // pred_check_branch
      %34 = sbr.rel (0) target = $region37
    $region36: #{seggcn_stage1.3} parent=1 // pred_region
      _
    $region37: #{seggcn_stage1.3} parent=1 // pred_fallthru
      _
    %v35 = vld [vmem:[%s1] sm:$0xff]
    %v36 = vld [vmem:[%s1 + $0x8] sm:$0xff]
    %v37 = vld [vmem:[%s1 + $0x10] sm:$0xff]
    %v38 = vld [vmem:[%s1 + $0x18] sm:$0xff]
    %v39 = vld [vmem:[%s5] sm:$0xf]
    %v40 = vld [vmem:[%s6] sm:$0x1]
    %v42 = vlaneseq
    %v43 = vshrl.u32 %v42, 7
    %v44 = vsub.s32 0, %v43
    %v45 = vrot.slane %v40, %v44
    %vm47 = vcmask 31744
    %v49 = vsel %vm47, %v35, 0
    %v52 = vsel %vm47, %v36, 0
    %v55 = vsel %vm47, %v37, 0
    %v58 = vsel %vm47, %v38, 0
    %vm60 = vcmask 1043456
    %v62 = vsel %vm60, %v39, 0
    %64 = vmatprep.subr.mxu0 0.0
    %65 = vmatpush1.msra.mxu0 %v62
    %66 = vmatprep.subr.mxu0 0.0
    %67 = vmatpush1.msra.mxu0 0.0
    %68 = vmatprep.subr.mxu0 0.0
    %69 = vmatpush1.msra.mxu0 0.0
    %70 = vmatprep.subr.mxu0 0.0
    %71 = vmatpush1.msra.mxu0 0.0
    %72 = vmatprep.subr.mxu0 0.0
    %73 = vmatpush1.msra.mxu0 0.0
    %74 = vmatprep.subr.mxu0 0.0
    %75 = vmatpush1.msra.mxu0 0.0
    %76 = vmatprep.subr.mxu0 0.0
    %77 = vmatpush1.msra.mxu0 0.0
    %78 = vmatprep.subr.mxu0 0.0
    %79 = vmatpush1.msra.mxu0 0.0
    %80 = vmatprep.subr.mxu0 0.0
    %81 = vmatpush1.msra.mxu0 0.0
    %82 = vmatprep.subr.mxu0 0.0
    %83 = vmatpush1.msra.mxu0 0.0
    %84 = vmatprep.subr.mxu0 0.0
    %85 = vmatpush1.msra.mxu0 0.0
    %86 = vmatprep.subr.mxu0 0.0
    %87 = vmatpush1.msra.mxu0 0.0
    %88 = vmatprep.subr.mxu0 0.0
    %89 = vmatpush1.msra.mxu0 0.0
    %90 = vmatprep.subr.mxu0 0.0
    %91 = vmatpush1.msra.mxu0 0.0
    %92 = vmatprep.subr.mxu0 0.0
    %93 = vmatpush1.msra.mxu0 0.0
    %94 = vmatprep.subr.mxu0 0.0
    %95 = vmatpush1.msra.mxu0 0.0
    %96 = vmatprep.subr.mxu0 0.0
    %97 = vmatpush1.msra.mxu0 0.0
    %98 = vmatprep.subr.mxu0 0.0
    %99 = vmatpush1.msra.mxu0 0.0
    %100 = vmatprep.subr.mxu0 0.0
    %101 = vmatpush1.msra.mxu0 0.0
    %102 = vmatprep.subr.mxu0 0.0
    %103 = vmatpush1.msra.mxu0 0.0
    %104 = vmatprep.subr.mxu0 0.0
    %105 = vmatpush1.msra.mxu0 0.0
    %106 = vmatprep.subr.mxu0 0.0
    %107 = vmatpush1.msra.mxu0 0.0
    %108 = vmatprep.subr.mxu0 0.0
    %109 = vmatpush1.msra.mxu0 0.0
    %110 = vmatprep.subr.mxu0 0.0
    %111 = vmatpush1.msra.mxu0 0.0
    %112 = vmatprep.subr.mxu0 0.0
    %113 = vmatpush1.msra.mxu0 0.0
    %114 = vmatprep.subr.mxu0 0.0
    %115 = vmatpush1.msra.mxu0 0.0
    %116 = vmatprep.subr.mxu0 0.0
    %117 = vmatpush1.msra.mxu0 0.0
    %118 = vmatprep.subr.mxu0 0.0
    %119 = vmatpush1.msra.mxu0 0.0
    %120 = vmatprep.subr.mxu0 0.0
    %121 = vmatpush1.msra.mxu0 0.0
    %122 = vmatprep.subr.mxu0 0.0
    %123 = vmatpush1.msra.mxu0 0.0
    %124 = vmatprep.subr.mxu0 0.0
    %125 = vmatpush1.msra.mxu0 0.0
    %126 = vmatprep.subr.mxu0 0.0
    %127 = vmatpush1.msra.mxu0 0.0
    %128 = vmatprep.mubr.f32.mxu0 0.0
    %129 = vmatmul.mubr.f32.gmra.mrb[0].mxu0 %v49
    %v130 = vpop.f32.mrb[0].mxu0
    %v131 = vadd.f32 %v45, %v130
    %v132 = vpop.f32.mrb[0].mxu0
    %133 = vmatprep.mubr.f32.mxu0 0.0
    %134 = vmatmul.mubr.f32.gmra.mrb[0].mxu0 %v52
    %v135 = vpop.f32.mrb[0].mxu0
    %v136 = vadd.f32 %v45, %v135
    %v137 = vpop.f32.mrb[0].mxu0
    %138 = vmatprep.mubr.f32.mxu0 0.0
    %139 = vmatmul.mubr.f32.gmra.mrb[0].mxu0 %v55
    %v140 = vpop.f32.mrb[0].mxu0
    %v141 = vadd.f32 %v45, %v140
    %v142 = vpop.f32.mrb[0].mxu0
    %143 = vmatprep.mubr.f32.mxu0 0.0
    %144 = vmatmul.mubr.f32.gmra.mrb[0].mxu0 %v58
    %v145 = vpop.f32.mrb[0].mxu0
    %v146 = vadd.f32 %v45, %v145
    %v147 = vpop.f32.mrb[0].mxu0
    %148 = vdwg.mxu0
    %v149 = vld [vmem:[%s3] sm:$0xff]
    %v150 = vld [vmem:[%s3 + $0x8] sm:$0xff]
    %v151 = vld [vmem:[%s3 + $0x10] sm:$0xff]
    %v152 = vld [vmem:[%s3 + $0x18] sm:$0x3f]
    %v154 = vsel %vm47, %v149, 0
    %v157 = vsel %vm47, %v150, 0
    %v160 = vsel %vm47, %v151, 0
    %v163 = vsel %vm47, %v152, 0
    %165 = vmatprep.subr.mxu0 0.0
    %166 = vmatpush1.msra.mxu0 %v62
    %167 = vmatprep.subr.mxu0 0.0
    %168 = vmatpush1.msra.mxu0 0.0
    %169 = vmatprep.subr.mxu0 0.0
    %170 = vmatpush1.msra.mxu0 0.0
    %171 = vmatprep.subr.mxu0 0.0
    %172 = vmatpush1.msra.mxu0 0.0
    %173 = vmatprep.subr.mxu0 0.0
    %174 = vmatpush1.msra.mxu0 0.0
    %175 = vmatprep.subr.mxu0 0.0
    %176 = vmatpush1.msra.mxu0 0.0
    %177 = vmatprep.subr.mxu0 0.0
    %178 = vmatpush1.msra.mxu0 0.0
    %179 = vmatprep.subr.mxu0 0.0
    %180 = vmatpush1.msra.mxu0 0.0
    %181 = vmatprep.subr.mxu0 0.0
    %182 = vmatpush1.msra.mxu0 0.0
    %183 = vmatprep.subr.mxu0 0.0
    %184 = vmatpush1.msra.mxu0 0.0
    %185 = vmatprep.subr.mxu0 0.0
    %186 = vmatpush1.msra.mxu0 0.0
    %187 = vmatprep.subr.mxu0 0.0
    %188 = vmatpush1.msra.mxu0 0.0
    %189 = vmatprep.subr.mxu0 0.0
    %190 = vmatpush1.msra.mxu0 0.0
    %191 = vmatprep.subr.mxu0 0.0
    %192 = vmatpush1.msra.mxu0 0.0
    %193 = vmatprep.subr.mxu0 0.0
    %194 = vmatpush1.msra.mxu0 0.0
    %195 = vmatprep.subr.mxu0 0.0
    %196 = vmatpush1.msra.mxu0 0.0
    %197 = vmatprep.subr.mxu0 0.0
    %198 = vmatpush1.msra.mxu0 0.0
    %199 = vmatprep.subr.mxu0 0.0
    %200 = vmatpush1.msra.mxu0 0.0
    %201 = vmatprep.subr.mxu0 0.0
    %202 = vmatpush1.msra.mxu0 0.0
    %203 = vmatprep.subr.mxu0 0.0
    %204 = vmatpush1.msra.mxu0 0.0
    %205 = vmatprep.subr.mxu0 0.0
    %206 = vmatpush1.msra.mxu0 0.0
    %207 = vmatprep.subr.mxu0 0.0
    %208 = vmatpush1.msra.mxu0 0.0
    %209 = vmatprep.subr.mxu0 0.0
    %210 = vmatpush1.msra.mxu0 0.0
    %211 = vmatprep.subr.mxu0 0.0
    %212 = vmatpush1.msra.mxu0 0.0
    %213 = vmatprep.subr.mxu0 0.0
    %214 = vmatpush1.msra.mxu0 0.0
    %215 = vmatprep.subr.mxu0 0.0
    %216 = vmatpush1.msra.mxu0 0.0
    %217 = vmatprep.subr.mxu0 0.0
    %218 = vmatpush1.msra.mxu0 0.0
    %219 = vmatprep.subr.mxu0 0.0
    %220 = vmatpush1.msra.mxu0 0.0
    %221 = vmatprep.subr.mxu0 0.0
    %222 = vmatpush1.msra.mxu0 0.0
    %223 = vmatprep.subr.mxu0 0.0
    %224 = vmatpush1.msra.mxu0 0.0
    %225 = vmatprep.subr.mxu0 0.0
    %226 = vmatpush1.msra.mxu0 0.0
    %227 = vmatprep.subr.mxu0 0.0
    %228 = vmatpush1.msra.mxu0 0.0
    %229 = vmatprep.mubr.f32.mxu0 0.0
    %230 = vmatmul.mubr.f32.gmra.mrb[0].mxu0 %v154
    %v231 = vpop.f32.mrb[0].mxu0
    %v232 = vadd.f32 %v45, %v231
    %v233 = vpop.f32.mrb[0].mxu0
    %234 = vmatprep.mubr.f32.mxu0 0.0
    %235 = vmatmul.mubr.f32.gmra.mrb[0].mxu0 %v157
    %v236 = vpop.f32.mrb[0].mxu0
    %v237 = vadd.f32 %v45, %v236
    %v238 = vpop.f32.mrb[0].mxu0
    %239 = vmatprep.mubr.f32.mxu0 0.0
    %240 = vmatmul.mubr.f32.gmra.mrb[0].mxu0 %v160
    %v241 = vpop.f32.mrb[0].mxu0
    %v242 = vadd.f32 %v45, %v241
    %v243 = vpop.f32.mrb[0].mxu0
    %244 = vmatprep.mubr.f32.mxu0 0.0
    %245 = vmatmul.mubr.f32.gmra.mrb[0].mxu0 %v163
    %v246 = vpop.f32.mrb[0].mxu0
    %v247 = vadd.f32 %v45, %v246
    %v248 = vpop.f32.mrb[0].mxu0
    %249 = vdwg.mxu0
    %v250 = vld [vmem:[%s0] sm:$0xff]
    %v251 = vld [vmem:[%s0 + $0x8] sm:$0xff]
    %v252 = vld [vmem:[%s0 + $0x10] sm:$0xff]
    %v253 = vld [vmem:[%s0 + $0x18] sm:$0xff]
    %vm254 = vcmask 261120
    %v256 = vsel %vm254, %v250, 0
    %v259 = vsel %vm254, %v251, 0
    %v262 = vsel %vm254, %v252, 0
    %v265 = vsel %vm254, %v253, 0
    %267 = vmatprep.subr.mxu0 0.0
    %268 = vmatpush1.msra.mxu0 %v131
    %269 = vmatprep.subr.mxu0 0.0
    %270 = vmatpush1.msra.mxu0 %v136
    %271 = vmatprep.subr.mxu0 0.0
    %272 = vmatpush1.msra.mxu0 %v141
    %273 = vmatprep.subr.mxu0 0.0
    %274 = vmatpush1.msra.mxu0 %v146
    %275 = vmatprep.subr.mxu0 0.0
    %276 = vmatpush1.msra.mxu0 0.0
    %277 = vmatprep.subr.mxu0 0.0
    %278 = vmatpush1.msra.mxu0 0.0
    %279 = vmatprep.subr.mxu0 0.0
    %280 = vmatpush1.msra.mxu0 0.0
    %281 = vmatprep.subr.mxu0 0.0
    %282 = vmatpush1.msra.mxu0 0.0
    %283 = vmatprep.subr.mxu0 0.0
    %284 = vmatpush1.msra.mxu0 0.0
    %285 = vmatprep.subr.mxu0 0.0
    %286 = vmatpush1.msra.mxu0 0.0
    %287 = vmatprep.subr.mxu0 0.0
    %288 = vmatpush1.msra.mxu0 0.0
    %289 = vmatprep.subr.mxu0 0.0
    %290 = vmatpush1.msra.mxu0 0.0
    %291 = vmatprep.subr.mxu0 0.0
    %292 = vmatpush1.msra.mxu0 0.0
    %293 = vmatprep.subr.mxu0 0.0
    %294 = vmatpush1.msra.mxu0 0.0
    %295 = vmatprep.subr.mxu0 0.0
    %296 = vmatpush1.msra.mxu0 0.0
    %297 = vmatprep.subr.mxu0 0.0
    %298 = vmatpush1.msra.mxu0 0.0
    %299 = vmatprep.subr.mxu0 0.0
    %300 = vmatpush1.msra.mxu0 0.0
    %301 = vmatprep.subr.mxu0 0.0
    %302 = vmatpush1.msra.mxu0 0.0
    %303 = vmatprep.subr.mxu0 0.0
    %304 = vmatpush1.msra.mxu0 0.0
    %305 = vmatprep.subr.mxu0 0.0
    %306 = vmatpush1.msra.mxu0 0.0
    %307 = vmatprep.subr.mxu0 0.0
    %308 = vmatpush1.msra.mxu0 0.0
    %309 = vmatprep.subr.mxu0 0.0
    %310 = vmatpush1.msra.mxu0 0.0
    %311 = vmatprep.subr.mxu0 0.0
    %312 = vmatpush1.msra.mxu0 0.0
    %313 = vmatprep.subr.mxu0 0.0
    %314 = vmatpush1.msra.mxu0 0.0
    %315 = vmatprep.subr.mxu0 0.0
    %316 = vmatpush1.msra.mxu0 0.0
    %317 = vmatprep.subr.mxu0 0.0
    %318 = vmatpush1.msra.mxu0 0.0
    %319 = vmatprep.subr.mxu0 0.0
    %320 = vmatpush1.msra.mxu0 0.0
    %321 = vmatprep.subr.mxu0 0.0
    %322 = vmatpush1.msra.mxu0 0.0
    %323 = vmatprep.subr.mxu0 0.0
    %324 = vmatpush1.msra.mxu0 0.0
    %325 = vmatprep.subr.mxu0 0.0
    %326 = vmatpush1.msra.mxu0 0.0
    %327 = vmatprep.subr.mxu0 0.0
    %328 = vmatpush1.msra.mxu0 0.0
    %329 = vmatprep.subr.mxu0 0.0
    %330 = vmatpush1.msra.mxu0 0.0
    %331 = vmatprep.mubr.f32.mxu0 0.0
    %332 = vmatmul.mubr.f32.gmra.mrb[0].mxu0 %v256
    %v333 = vpop.f32.mrb[0].mxu0
    %v334 = vadd.f32 0.0, %v333
    %v335 = vpop.f32.mrb[0].mxu0
    %336 = vmatprep.mubr.f32.mxu0 0.0
    %337 = vmatmul.mubr.f32.gmra.mrb[0].mxu0 %v259
    %v338 = vpop.f32.mrb[0].mxu0
    %v339 = vadd.f32 0.0, %v338
    %v340 = vpop.f32.mrb[0].mxu0
    %341 = vmatprep.mubr.f32.mxu0 0.0
    %342 = vmatmul.mubr.f32.gmra.mrb[0].mxu0 %v262
    %v343 = vpop.f32.mrb[0].mxu0
    %v344 = vadd.f32 0.0, %v343
    %v345 = vpop.f32.mrb[0].mxu0
    %346 = vmatprep.mubr.f32.mxu0 0.0
    %347 = vmatmul.mubr.f32.gmra.mrb[0].mxu0 %v265
    %v348 = vpop.f32.mrb[0].mxu0
    %v349 = vadd.f32 0.0, %v348
    %v350 = vpop.f32.mrb[0].mxu0
    %351 = vdwg.mxu0
    %v352 = vld [vmem:[%s7] sm:$0xff]
    %v353 = vld [vmem:[%s7 + $0x8] sm:$0xff]
    %v354 = vld [vmem:[%s7 + $0x10] sm:$0xff]
    %v355 = vld [vmem:[%s7 + $0x18] sm:$0xff]
    %v356 = vld [vmem:[%s8] sm:$0x1]
    %v358 = vlaneseq
    %v359 = vshrl.u32 %v358, 7
    %v360 = vsub.s32 0, %v359
    %v361 = vrot.slane %v356, %v360
    %v364 = vsel %vm254, %v334, 0
    %v367 = vsel %vm254, %v339, 0
    %v370 = vsel %vm254, %v344, 0
    %v373 = vsel %vm254, %v349, 0
    %375 = vmatprep.subr.mxu0 0.0
    %376 = vmatpush1.msra.mxu0 %v352
    %377 = vmatprep.subr.mxu0 0.0
    %378 = vmatpush1.msra.mxu0 %v353
    %379 = vmatprep.subr.mxu0 0.0
    %380 = vmatpush1.msra.mxu0 %v354
    %381 = vmatprep.subr.mxu0 0.0
    %382 = vmatpush1.msra.mxu0 %v355
    %383 = vmatprep.subr.mxu0 0.0
    %384 = vmatpush1.msra.mxu0 0.0
    %385 = vmatprep.subr.mxu0 0.0
    %386 = vmatpush1.msra.mxu0 0.0
    %387 = vmatprep.subr.mxu0 0.0
    %388 = vmatpush1.msra.mxu0 0.0
    %389 = vmatprep.subr.mxu0 0.0
    %390 = vmatpush1.msra.mxu0 0.0
    %391 = vmatprep.subr.mxu0 0.0
    %392 = vmatpush1.msra.mxu0 0.0
    %393 = vmatprep.subr.mxu0 0.0
    %394 = vmatpush1.msra.mxu0 0.0
    %395 = vmatprep.subr.mxu0 0.0
    %396 = vmatpush1.msra.mxu0 0.0
    %397 = vmatprep.subr.mxu0 0.0
    %398 = vmatpush1.msra.mxu0 0.0
    %399 = vmatprep.subr.mxu0 0.0
    %400 = vmatpush1.msra.mxu0 0.0
    %401 = vmatprep.subr.mxu0 0.0
    %402 = vmatpush1.msra.mxu0 0.0
    %403 = vmatprep.subr.mxu0 0.0
    %404 = vmatpush1.msra.mxu0 0.0
    %405 = vmatprep.subr.mxu0 0.0
    %406 = vmatpush1.msra.mxu0 0.0
    %407 = vmatprep.subr.mxu0 0.0
    %408 = vmatpush1.msra.mxu0 0.0
    %409 = vmatprep.subr.mxu0 0.0
    %410 = vmatpush1.msra.mxu0 0.0
    %411 = vmatprep.subr.mxu0 0.0
    %412 = vmatpush1.msra.mxu0 0.0
    %413 = vmatprep.subr.mxu0 0.0
    %414 = vmatpush1.msra.mxu0 0.0
    %415 = vmatprep.subr.mxu0 0.0
    %416 = vmatpush1.msra.mxu0 0.0
    %417 = vmatprep.subr.mxu0 0.0
    %418 = vmatpush1.msra.mxu0 0.0
    %419 = vmatprep.subr.mxu0 0.0
    %420 = vmatpush1.msra.mxu0 0.0
    %421 = vmatprep.subr.mxu0 0.0
    %422 = vmatpush1.msra.mxu0 0.0
    %423 = vmatprep.subr.mxu0 0.0
    %424 = vmatpush1.msra.mxu0 0.0
    %425 = vmatprep.subr.mxu0 0.0
    %426 = vmatpush1.msra.mxu0 0.0
    %427 = vmatprep.subr.mxu0 0.0
    %428 = vmatpush1.msra.mxu0 0.0
    %429 = vmatprep.subr.mxu0 0.0
    %430 = vmatpush1.msra.mxu0 0.0
    %431 = vmatprep.subr.mxu0 0.0
    %432 = vmatpush1.msra.mxu0 0.0
    %433 = vmatprep.subr.mxu0 0.0
    %434 = vmatpush1.msra.mxu0 0.0
    %435 = vmatprep.subr.mxu0 0.0
    %436 = vmatpush1.msra.mxu0 0.0
    %437 = vmatprep.subr.mxu0 0.0
    %438 = vmatpush1.msra.mxu0 0.0
    %439 = vmatprep.mubr.f32.mxu0 0.0
    %440 = vmatmul.mubr.f32.gmra.mrb[0].mxu0 %v364
    %v441 = vpop.f32.mrb[0].mxu0
    %v442 = vadd.f32 %v361, %v441
    %v443 = vpop.f32.mrb[0].mxu0
    %444 = vmatprep.mubr.f32.mxu0 0.0
    %445 = vmatmul.mubr.f32.gmra.mrb[0].mxu0 %v367
    %v446 = vpop.f32.mrb[0].mxu0
    %v447 = vadd.f32 %v361, %v446
    %v448 = vpop.f32.mrb[0].mxu0
    %449 = vmatprep.mubr.f32.mxu0 0.0
    %450 = vmatmul.mubr.f32.gmra.mrb[0].mxu0 %v370
    %v451 = vpop.f32.mrb[0].mxu0
    %v452 = vadd.f32 %v361, %v451
    %v453 = vpop.f32.mrb[0].mxu0
    %454 = vmatprep.mubr.f32.mxu0 0.0
    %455 = vmatmul.mubr.f32.gmra.mrb[0].mxu0 %v373
    %v456 = vpop.f32.mrb[0].mxu0
    %v457 = vadd.f32 %v361, %v456
    %v458 = vpop.f32.mrb[0].mxu0
    %459 = vdwg.mxu0
    %v460 = vmul.f32 %v442, %v442
    %v461 = vmul.f32 %v447, %v447
    %v462 = vmul.f32 %v452, %v452
    %v463 = vmul.f32 %v457, %v457
    %v464 = vsel %vm254, %v460, 0.0
    %465 = vadd.xlane.f32.xlu0 %v464
    %v466 = vpop.xlane.xlu0 %465
    %v467 = vsel %vm254, %v461, 0.0
    %468 = vadd.xlane.f32.xlu0 %v467
    %v469 = vpop.xlane.xlu0 %468
    %v470 = vsel %vm254, %v462, 0.0
    %471 = vadd.xlane.f32.xlu0 %v470
    %v472 = vpop.xlane.xlu0 %471
    %v473 = vsel %vm254, %v463, 0.0
    %474 = vadd.xlane.f32.xlu0 %v473
    %v475 = vpop.xlane.xlu0 %474
    %v476 = vmax.f32 %v466, 1e-24
    %v477 = vmax.f32 %v469, 1e-24
    %v478 = vmax.f32 %v472, 1e-24
    %v479 = vmax.f32 %v475, 1e-24
    %v480 = vrsqrt.pop %v476
    %v481 = vrsqrt.pop %v477
    %v482 = vrsqrt.pop %v478
    %v483 = vrsqrt.pop %v479
    %v484 = vmul.f32 %v442, %v480
    %v485 = vmul.f32 %v447, %v481
    %v486 = vmul.f32 %v452, %v482
    %v487 = vmul.f32 %v457, %v483
    %488 = vst.msk [vmem:[#allocation2] sm:$0xff] %vm254, %v484
    %489 = vst.msk [vmem:[#allocation2 + $0x8] sm:$0xff] %vm254, %v485
    %490 = vst.msk [vmem:[#allocation2 + $0x10] sm:$0xff] %vm254, %v486
    %491 = vst.msk [vmem:[#allocation2 + $0x18] sm:$0xff] %vm254, %v487
    %v492 = vld [vmem:[%s2] sm:$0xff]
    %v493 = vld [vmem:[%s2 + $0x8] sm:$0xff]
    %v494 = vld [vmem:[%s2 + $0x10] sm:$0xff]
    %v495 = vld [vmem:[%s2 + $0x18] sm:$0x3f]
    %vm496 = vcmask 244736
    %v498 = vsel %vm496, %v492, 0
    %v501 = vsel %vm496, %v493, 0
    %v504 = vsel %vm496, %v494, 0
    %v507 = vsel %vm496, %v495, 0
    %vm509 = vcmask 1045504
    %v511 = vsel %vm509, %v247, 0
    %513 = vmatprep.subr.mxu0 0.0
    %514 = vmatpush1.msra.mxu0 %v232
    %515 = vmatprep.subr.mxu0 0.0
    %516 = vmatpush1.msra.mxu0 %v237
    %517 = vmatprep.subr.mxu0 0.0
    %518 = vmatpush1.msra.mxu0 %v242
    %519 = vmatprep.subr.mxu0 0.0
    %520 = vmatpush1.msra.mxu0 %v511
    %521 = vmatprep.subr.mxu0 0.0
    %522 = vmatpush1.msra.mxu0 0.0
    %523 = vmatprep.subr.mxu0 0.0
    %524 = vmatpush1.msra.mxu0 0.0
    %525 = vmatprep.subr.mxu0 0.0
    %526 = vmatpush1.msra.mxu0 0.0
    %527 = vmatprep.subr.mxu0 0.0
    %528 = vmatpush1.msra.mxu0 0.0
    %529 = vmatprep.subr.mxu0 0.0
    %530 = vmatpush1.msra.mxu0 0.0
    %531 = vmatprep.subr.mxu0 0.0
    %532 = vmatpush1.msra.mxu0 0.0
    %533 = vmatprep.subr.mxu0 0.0
    %534 = vmatpush1.msra.mxu0 0.0
    %535 = vmatprep.subr.mxu0 0.0
    %536 = vmatpush1.msra.mxu0 0.0
    %537 = vmatprep.subr.mxu0 0.0
    %538 = vmatpush1.msra.mxu0 0.0
    %539 = vmatprep.subr.mxu0 0.0
    %540 = vmatpush1.msra.mxu0 0.0
    %541 = vmatprep.subr.mxu0 0.0
    %542 = vmatpush1.msra.mxu0 0.0
    %543 = vmatprep.subr.mxu0 0.0
    %544 = vmatpush1.msra.mxu0 0.0
    %545 = vmatprep.subr.mxu0 0.0
    %546 = vmatpush1.msra.mxu0 0.0
    %547 = vmatprep.subr.mxu0 0.0
    %548 = vmatpush1.msra.mxu0 0.0
    %549 = vmatprep.subr.mxu0 0.0
    %550 = vmatpush1.msra.mxu0 0.0
    %551 = vmatprep.subr.mxu0 0.0
    %552 = vmatpush1.msra.mxu0 0.0
    %553 = vmatprep.subr.mxu0 0.0
    %554 = vmatpush1.msra.mxu0 0.0
    %555 = vmatprep.subr.mxu0 0.0
    %556 = vmatpush1.msra.mxu0 0.0
    %557 = vmatprep.subr.mxu0 0.0
    %558 = vmatpush1.msra.mxu0 0.0
    %559 = vmatprep.subr.mxu0 0.0
    %560 = vmatpush1.msra.mxu0 0.0
    %561 = vmatprep.subr.mxu0 0.0
    %562 = vmatpush1.msra.mxu0 0.0
    %563 = vmatprep.subr.mxu0 0.0
    %564 = vmatpush1.msra.mxu0 0.0
    %565 = vmatprep.subr.mxu0 0.0
    %566 = vmatpush1.msra.mxu0 0.0
    %567 = vmatprep.subr.mxu0 0.0
    %568 = vmatpush1.msra.mxu0 0.0
    %569 = vmatprep.subr.mxu0 0.0
    %570 = vmatpush1.msra.mxu0 0.0
    %571 = vmatprep.subr.mxu0 0.0
    %572 = vmatpush1.msra.mxu0 0.0
    %573 = vmatprep.subr.mxu0 0.0
    %574 = vmatpush1.msra.mxu0 0.0
    %575 = vmatprep.subr.mxu0 0.0
    %576 = vmatpush1.msra.mxu0 0.0
    %577 = vmatprep.mubr.f32.mxu0 0.0
    %578 = vmatmul.mubr.f32.gmra.mrb[0].mxu0 %v498
    %v579 = vpop.f32.mrb[0].mxu0
    %v580 = vadd.f32 0.0, %v579
    %v581 = vpop.f32.mrb[0].mxu0
    %582 = vmatprep.mubr.f32.mxu0 0.0
    %583 = vmatmul.mubr.f32.gmra.mrb[0].mxu0 %v501
    %v584 = vpop.f32.mrb[0].mxu0
    %v585 = vadd.f32 0.0, %v584
    %v586 = vpop.f32.mrb[0].mxu0
    %587 = vmatprep.mubr.f32.mxu0 0.0
    %588 = vmatmul.mubr.f32.gmra.mrb[0].mxu0 %v504
    %v589 = vpop.f32.mrb[0].mxu0
    %v590 = vadd.f32 0.0, %v589
    %v591 = vpop.f32.mrb[0].mxu0
    %592 = vmatprep.mubr.f32.mxu0 0.0
    %593 = vmatmul.mubr.f32.gmra.mrb[0].mxu0 %v507
    %v594 = vpop.f32.mrb[0].mxu0
    %v595 = vadd.f32 0.0, %v594
    %v596 = vpop.f32.mrb[0].mxu0
    %597 = vdwg.mxu0
    %v598 = vld [vmem:[%s7] sm:$0xff]
    %v599 = vld [vmem:[%s7 + $0x8] sm:$0xff]
    %v600 = vld [vmem:[%s7 + $0x10] sm:$0xff]
    %v601 = vld [vmem:[%s7 + $0x18] sm:$0xff]
    %v602 = vld [vmem:[%s8] sm:$0x1]
    %v604 = vlaneseq
    %v605 = vshrl.u32 %v604, 7
    %v606 = vsub.s32 0, %v605
    %v607 = vrot.slane %v602, %v606
    %v610 = vsel %vm254, %v580, 0
    %v613 = vsel %vm254, %v585, 0
    %v616 = vsel %vm254, %v590, 0
    %v619 = vsel %vm254, %v595, 0
    %621 = vmatprep.subr.mxu0 0.0
    %622 = vmatpush1.msra.mxu0 %v598
    %623 = vmatprep.subr.mxu0 0.0
    %624 = vmatpush1.msra.mxu0 %v599
    %625 = vmatprep.subr.mxu0 0.0
    %626 = vmatpush1.msra.mxu0 %v600
    %627 = vmatprep.subr.mxu0 0.0
    %628 = vmatpush1.msra.mxu0 %v601
    %629 = vmatprep.subr.mxu0 0.0
    %630 = vmatpush1.msra.mxu0 0.0
    %631 = vmatprep.subr.mxu0 0.0
    %632 = vmatpush1.msra.mxu0 0.0
    %633 = vmatprep.subr.mxu0 0.0
    %634 = vmatpush1.msra.mxu0 0.0
    %635 = vmatprep.subr.mxu0 0.0
    %636 = vmatpush1.msra.mxu0 0.0
    %637 = vmatprep.subr.mxu0 0.0
    %638 = vmatpush1.msra.mxu0 0.0
    %639 = vmatprep.subr.mxu0 0.0
    %640 = vmatpush1.msra.mxu0 0.0
    %641 = vmatprep.subr.mxu0 0.0
    %642 = vmatpush1.msra.mxu0 0.0
    %643 = vmatprep.subr.mxu0 0.0
    %644 = vmatpush1.msra.mxu0 0.0
    %645 = vmatprep.subr.mxu0 0.0
    %646 = vmatpush1.msra.mxu0 0.0
    %647 = vmatprep.subr.mxu0 0.0
    %648 = vmatpush1.msra.mxu0 0.0
    %649 = vmatprep.subr.mxu0 0.0
    %650 = vmatpush1.msra.mxu0 0.0
    %651 = vmatprep.subr.mxu0 0.0
    %652 = vmatpush1.msra.mxu0 0.0
    %653 = vmatprep.subr.mxu0 0.0
    %654 = vmatpush1.msra.mxu0 0.0
    %655 = vmatprep.subr.mxu0 0.0
    %656 = vmatpush1.msra.mxu0 0.0
    %657 = vmatprep.subr.mxu0 0.0
    %658 = vmatpush1.msra.mxu0 0.0
    %659 = vmatprep.subr.mxu0 0.0
    %660 = vmatpush1.msra.mxu0 0.0
    %661 = vmatprep.subr.mxu0 0.0
    %662 = vmatpush1.msra.mxu0 0.0
    %663 = vmatprep.subr.mxu0 0.0
    %664 = vmatpush1.msra.mxu0 0.0
    %665 = vmatprep.subr.mxu0 0.0
    %666 = vmatpush1.msra.mxu0 0.0
    %667 = vmatprep.subr.mxu0 0.0
    %668 = vmatpush1.msra.mxu0 0.0
    %669 = vmatprep.subr.mxu0 0.0
    %670 = vmatpush1.msra.mxu0 0.0
    %671 = vmatprep.subr.mxu0 0.0
    %672 = vmatpush1.msra.mxu0 0.0
    %673 = vmatprep.subr.mxu0 0.0
    %674 = vmatpush1.msra.mxu0 0.0
    %675 = vmatprep.subr.mxu0 0.0
    %676 = vmatpush1.msra.mxu0 0.0
    %677 = vmatprep.subr.mxu0 0.0
    %678 = vmatpush1.msra.mxu0 0.0
    %679 = vmatprep.subr.mxu0 0.0
    %680 = vmatpush1.msra.mxu0 0.0
    %681 = vmatprep.subr.mxu0 0.0
    %682 = vmatpush1.msra.mxu0 0.0
    %683 = vmatprep.subr.mxu0 0.0
    %684 = vmatpush1.msra.mxu0 0.0
    %685 = vmatprep.mubr.f32.mxu0 0.0
    %686 = vmatmul.mubr.f32.gmra.mrb[0].mxu0 %v610
    %v687 = vpop.f32.mrb[0].mxu0
    %v688 = vadd.f32 %v607, %v687
    %v689 = vpop.f32.mrb[0].mxu0
    %690 = vmatprep.mubr.f32.mxu0 0.0
    %691 = vmatmul.mubr.f32.gmra.mrb[0].mxu0 %v613
    %v692 = vpop.f32.mrb[0].mxu0
    %v693 = vadd.f32 %v607, %v692
    %v694 = vpop.f32.mrb[0].mxu0
    %695 = vmatprep.mubr.f32.mxu0 0.0
    %696 = vmatmul.mubr.f32.gmra.mrb[0].mxu0 %v616
    %v697 = vpop.f32.mrb[0].mxu0
    %v698 = vadd.f32 %v607, %v697
    %v699 = vpop.f32.mrb[0].mxu0
    %700 = vmatprep.mubr.f32.mxu0 0.0
    %701 = vmatmul.mubr.f32.gmra.mrb[0].mxu0 %v619
    %v702 = vpop.f32.mrb[0].mxu0
    %v703 = vadd.f32 %v607, %v702
    %v704 = vpop.f32.mrb[0].mxu0
    %705 = vdwg.mxu0
    %v706 = vlaneseq
    %v707 = vshrl.u32 %v706, 7
    %v708 = vld [vmem:[%s4] sm:$0x1]
    %v709 = vlaneseq
    %v710 = vshrl.u32 %v709, 7
    %v711 = vsub.s32 0, %v710
    %v712 = vrot.slane %v708, %v711
    %vm713 = vcmp.eq.s32.totalorder %v707, %v712
    %v714 = vsel %vm713, 1.0, 0.0
    %v715 = vsel %vm496, %v714, 0.0
    %716 = vadd.xlane.f32.xlu0 %v715
    %v717 = vpop.xlane.xlu0 %716
    %v718 = vmax.f32 %v717, 1.0
    %v720 = vsel %vm496, %v714, 0
    %v723 = vsel %vm509, %v703, 0
    %725 = vmatprep.subr.mxu0 0.0
    %726 = vmatpush1.msra.mxu0 %v688
    %727 = vmatprep.subr.mxu0 0.0
    %728 = vmatpush1.msra.mxu0 %v693
    %729 = vmatprep.subr.mxu0 0.0
    %730 = vmatpush1.msra.mxu0 %v698
    %731 = vmatprep.subr.mxu0 0.0
    %732 = vmatpush1.msra.mxu0 %v723
    %733 = vmatprep.subr.mxu0 0.0
    %734 = vmatpush1.msra.mxu0 0.0
    %735 = vmatprep.subr.mxu0 0.0
    %736 = vmatpush1.msra.mxu0 0.0
    %737 = vmatprep.subr.mxu0 0.0
    %738 = vmatpush1.msra.mxu0 0.0
    %739 = vmatprep.subr.mxu0 0.0
    %740 = vmatpush1.msra.mxu0 0.0
    %741 = vmatprep.subr.mxu0 0.0
    %742 = vmatpush1.msra.mxu0 0.0
    %743 = vmatprep.subr.mxu0 0.0
    %744 = vmatpush1.msra.mxu0 0.0
    %745 = vmatprep.subr.mxu0 0.0
    %746 = vmatpush1.msra.mxu0 0.0
    %747 = vmatprep.subr.mxu0 0.0
    %748 = vmatpush1.msra.mxu0 0.0
    %749 = vmatprep.subr.mxu0 0.0
    %750 = vmatpush1.msra.mxu0 0.0
    %751 = vmatprep.subr.mxu0 0.0
    %752 = vmatpush1.msra.mxu0 0.0
    %753 = vmatprep.subr.mxu0 0.0
    %754 = vmatpush1.msra.mxu0 0.0
    %755 = vmatprep.subr.mxu0 0.0
    %756 = vmatpush1.msra.mxu0 0.0
    %757 = vmatprep.subr.mxu0 0.0
    %758 = vmatpush1.msra.mxu0 0.0
    %759 = vmatprep.subr.mxu0 0.0
    %760 = vmatpush1.msra.mxu0 0.0
    %761 = vmatprep.subr.mxu0 0.0
    %762 = vmatpush1.msra.mxu0 0.0
    %763 = vmatprep.subr.mxu0 0.0
    %764 = vmatpush1.msra.mxu0 0.0
    %765 = vmatprep.subr.mxu0 0.0
    %766 = vmatpush1.msra.mxu0 0.0
    %767 = vmatprep.subr.mxu0 0.0
    %768 = vmatpush1.msra.mxu0 0.0
    %769 = vmatprep.subr.mxu0 0.0
    %770 = vmatpush1.msra.mxu0 0.0
    %771 = vmatprep.subr.mxu0 0.0
    %772 = vmatpush1.msra.mxu0 0.0
    %773 = vmatprep.subr.mxu0 0.0
    %774 = vmatpush1.msra.mxu0 0.0
    %775 = vmatprep.subr.mxu0 0.0
    %776 = vmatpush1.msra.mxu0 0.0
    %777 = vmatprep.subr.mxu0 0.0
    %778 = vmatpush1.msra.mxu0 0.0
    %779 = vmatprep.subr.mxu0 0.0
    %780 = vmatpush1.msra.mxu0 0.0
    %781 = vmatprep.subr.mxu0 0.0
    %782 = vmatpush1.msra.mxu0 0.0
    %783 = vmatprep.subr.mxu0 0.0
    %784 = vmatpush1.msra.mxu0 0.0
    %785 = vmatprep.subr.mxu0 0.0
    %786 = vmatpush1.msra.mxu0 0.0
    %787 = vmatprep.subr.mxu0 0.0
    %788 = vmatpush1.msra.mxu0 0.0
    %789 = vmatprep.mubr.f32.mxu0 0.0
    %790 = vmatmul.mubr.f32.gmra.mrb[0].mxu0 %v720
    %v791 = vpop.f32.mrb[0].mxu0
    %v792 = vadd.f32 0.0, %v791
    %v793 = vpop.f32.mrb[0].mxu0
    %794 = vdwg.mxu0
    %v795 = vrcp.pop %v718
    %v796 = vmul.f32 %v792, %v795
    %v797 = vmul.f32 %v796, %v796
    %v798 = vsel %vm254, %v797, 0.0
    %799 = vadd.xlane.f32.xlu0 %v798
    %v800 = vpop.xlane.xlu0 %799
    %v801 = vmax.f32 %v800, 1e-24
    %v802 = vrsqrt.pop %v801
    %v803 = vmul.f32 %v796, %v802
    %804 = vst.msk [vmem:[%s10] sm:$0xff] %vm254, %v803
    // Predicated region
    $region38: #{seggcn_stage1.3} parent=1 // pred_check
      _
    $region39: #{seggcn_stage1.3} parent=1 // pred_check_branch
      %806 = sbr.rel (0) target = $region41
    $region40: #{seggcn_stage1.3} parent=1 // pred_region
      %s808 = ssub.s32 512, 512
      %809 = vsyncadd [#allocation3], %s808
      %s810 = sshll.u32 [#allocation2], 4
      %s811 = int_to_ptr.vmem [resolvable:$true] %s810
      %816 = dma.vmem_to_hbm [thread:$0]  %s811, 512, %s9, [#allocation3], 128, 128, 8
    $region41: #{seggcn_stage1.3} parent=1 // pred_fallthru
      _
    // Predicated region
    $region42: #{seggcn_stage1.3} parent=1 // pred_check
      _
    $region43: #{seggcn_stage1.3} parent=1 // pred_check_branch
      %818 = sbr.rel (0) target = $region45
    $region44: #{seggcn_stage1.3} parent=1 // pred_region
      _
    $region45: #{seggcn_stage1.3} parent=1 // pred_fallthru
      _
    // Predicated region
    $region46: #{seggcn_stage1.3} parent=1 // pred_check
      _
    $region47: #{seggcn_stage1.3} parent=1 // pred_check_branch
      %820 = sbr.rel (0) target = $region49
    $region48: #{seggcn_stage1.3} parent=1 // pred_region
      %821 = dma.done [#allocation3], 512
    $region49: #{seggcn_stage1.3} parent=1 // pred_fallthru
      _
    // Predicated region
    $region50: #{seggcn_stage1.3} parent=1 // pred_check
      _
    $region51: #{seggcn_stage1.3} parent=1 // pred_check_branch
      %823 = sbr.rel (0) target = $region53
    $region52: #{seggcn_stage1.3} parent=1 // pred_region
      _
    $region53: #{seggcn_stage1.3} parent=1 // pred_fallthru
      _
    %824 = vsyncpa [#allocation3], 1

</llo_original>
